<compile_context>
chip_gen: v6e
topology: v6e:2x2x1
jax: 0.10.0
libtpu: 0.0.40
codegen_flags: <defaults>
</compile_context>

<pallas_src>
import functools

import jax
import jax.numpy as jnp
from jax.experimental import pallas as pl
from jax.experimental.pallas import tpu as pltpu


def rbm_kernel(v_ref, w_ref, wt_ref, hb_ref, vb_ref, uh_ref, uv_ref, vout_ref, *, k):
    tb = v_ref.shape[0]
    n_hin, n_vis = w_ref.shape

    W = w_ref[...]        # (n_hin, n_vis) bf16, VMEM-resident across the grid
    WT = wt_ref[...]      # (n_vis, n_hin) bf16 (transpose hoisted to the wrapper)
    # Hoist bias broadcasts out of the unrolled CD-k chain (JAX does not CSE them).
    hb = jnp.broadcast_to(hb_ref[...], (tb, n_hin)).astype(jnp.float32)
    vb = jnp.broadcast_to(vb_ref[...], (tb, n_vis)).astype(jnp.float32)

    def v_to_h(vis, u):
        pre = jnp.dot(vis.astype(jnp.bfloat16), WT,
                      preferred_element_type=jnp.float32) + hb
        p_h = jax.nn.sigmoid(pre)
        # torch: relu(sign(p - u)) == 1.0 where p > u else 0.0
        return jnp.where(p_h > u, 1.0, 0.0).astype(jnp.float32)

    def h_to_v(hid, u):
        pre = jnp.dot(hid.astype(jnp.bfloat16), W,
                      preferred_element_type=jnp.float32) + vb
        p_v = jax.nn.sigmoid(pre)
        return jnp.where(p_v > u, 1.0, 0.0).astype(jnp.float32)

    v0 = v_ref[...].astype(jnp.float32)
    h = v_to_h(v0, uh_ref[0])
    v_ = v0
    # k is a small static int (CD-k); for large k switch to lax.fori_loop
    # carrying (h, v_) to bound code size / vreg live ranges.
    for step in range(k):
        v_ = h_to_v(h, uv_ref[step])
        h = v_to_h(v_, uh_ref[step + 1])

    vout_ref[...] = v_.astype(vout_ref.dtype)


def _vmem_limit_bytes(tb, n_vis, n_hin, k):
    f32, bf16 = 4, 2
    weights = 2 * n_hin * n_vis * bf16 + (n_hin + n_vis) * f32       # W, W.T, biases
    tiles = (2 * tb * n_vis * f32                                    # v tile + out tile
             + (k + 1) * tb * n_hin * f32                            # u_h tile
             + k * tb * n_vis * f32)                                 # u_v tile
    interm = 4 * tb * (n_vis + n_hin) * f32                          # chain temporaries
    est = 2 * (weights + tiles) + interm                             # x2: double buffering
    # explicit limit (feedback for v7x's 64 MiB VMEM), with headroom + clamp
    return int(min(max(2 * est, 8 << 20), 64 << 20))


def rbm_forward(v, W, v_bias, h_bias, *, k, key, block_b=None):
    """Pallas implementation of RBM.forward; returns (v, v_k)."""
    assert k >= 1
    B, n_vis = v.shape
    n_hin = W.shape[0]

    if block_b is None:
        block_b = min(B, 256)
    if B % block_b != 0:          # fall back to a single block if B isn't tileable
        block_b = B
    grid = (B // block_b,)

    # One-time transpose + bf16 cast outside the kernel (MXU-native operands).
    w_bf = W.astype(jnp.bfloat16)
    wt_bf = W.T.astype(jnp.bfloat16)
    hb = h_bias.reshape(1, n_hin).astype(jnp.float32)
    vb = v_bias.reshape(1, n_vis).astype(jnp.float32)

    # Uniform noise for the 2k+1 Bernoulli sampling passes, sliced per batch tile.
    k_h, k_v = jax.random.split(key)
    u_h = jax.random.uniform(k_h, (k + 1, B, n_hin), dtype=jnp.float32)
    u_v = jax.random.uniform(k_v, (k, B, n_vis), dtype=jnp.float32)

    v_k = pl.pallas_call(
        functools.partial(rbm_kernel, k=k),
        out_shape=jax.ShapeDtypeStruct((B, n_vis), jnp.float32),
        grid=grid,
        in_specs=[
            pl.BlockSpec((block_b, n_vis), lambda i: (i, 0)),            # v tile
            pl.BlockSpec((n_hin, n_vis), lambda i: (0, 0)),              # W (replicated)
            pl.BlockSpec((n_vis, n_hin), lambda i: (0, 0)),              # W.T (replicated)
            pl.BlockSpec((1, n_hin), lambda i: (0, 0)),                  # h_bias
            pl.BlockSpec((1, n_vis), lambda i: (0, 0)),                  # v_bias
            pl.BlockSpec((k + 1, block_b, n_hin), lambda i: (0, i, 0)),  # u_h tile
            pl.BlockSpec((k, block_b, n_vis), lambda i: (0, i, 0)),      # u_v tile
        ],
        out_specs=pl.BlockSpec((block_b, n_vis), lambda i: (i, 0)),
        compiler_params=pltpu.CompilerParams(
            dimension_semantics=("parallel",),
            vmem_limit_bytes=_vmem_limit_bytes(block_b, n_vis, n_hin, k),
        ),
    )(v.astype(jnp.float32), w_bf, wt_bf, hb, vb, u_h, u_v)

    return v, v_k


if __name__ == "__main__":
    # Small, TPU-tile-friendly shapes consistent with RBM(n_vis, n_hin, k).
    B, N_VIS, N_HIN, K = 256, 256, 128, 3
    TB = 128                      # 2 grid blocks; MXU-friendly batch tile

    key = jax.random.PRNGKey(0)
    k_w, k_v, k_noise = jax.random.split(key, 3)

    # Parameter init mirroring __init__: W ~ 0.01 * randn, biases zero.
    W = (0.01 * jax.random.normal(k_w, (N_HIN, N_VIS))).astype(jnp.float32)
    v_bias = jnp.zeros((N_VIS,), dtype=jnp.float32)
    h_bias = jnp.zeros((N_HIN,), dtype=jnp.float32)

    # Binary visible units (MNIST-like Bernoulli input).
    v = (jax.random.uniform(k_v, (B, N_VIS)) > 0.5).astype(jnp.float32)

    v_in, v_k = rbm_forward(v, W, v_bias, h_bias, k=K, key=k_noise, block_b=TB)
    jax.block_until_ready(v_k)

    assert v_in.shape == (B, N_VIS) and v_k.shape == (B, N_VIS)
    assert v_k.dtype == jnp.float32
    # Sampled reconstructions must be binary {0, 1}.
    assert bool(jnp.all((v_k == 0.0) | (v_k == 1.0)))

    print("KERNEL_OK")
</pallas_src>

<mosaic_0001>
module attributes {stable_mosaic.version = 11 : i64} {
  func.func @rbm_kernel(%arg0: i32, %arg1: memref<128x256xf32, #tpu.memory_space<vmem>>, %arg2: memref<128x256xbf16, #tpu.memory_space<vmem>>, %arg3: memref<256x128xbf16, #tpu.memory_space<vmem>>, %arg4: memref<1x128xf32, #tpu.memory_space<vmem>>, %arg5: memref<1x256xf32, #tpu.memory_space<vmem>>, %arg6: memref<4x128x128xf32, #tpu.memory_space<vmem>>, %arg7: memref<3x128x256xf32, #tpu.memory_space<vmem>>, %arg8: memref<128x256xf32, #tpu.memory_space<vmem>>) attributes {dimension_semantics = [#tpu.dimension_semantics<parallel>], iteration_bounds = array<i64: 2>, scalar_prefetch = 0 : i64, scratch_operands = 0 : i64, tpu.core_type = #tpu.core_type<tc>, window_params = [{transform_indices = @transform_0, window_bounds = array<i64: 128, 256>}, {pipeline_mode = #tpu.pipeline_mode<synchronous>, transform_indices = @transform_1, window_bounds = array<i64: 128, 256>}, {pipeline_mode = #tpu.pipeline_mode<synchronous>, transform_indices = @transform_2, window_bounds = array<i64: 256, 128>}, {pipeline_mode = #tpu.pipeline_mode<synchronous>, transform_indices = @transform_3, window_bounds = array<i64: 1, 128>}, {pipeline_mode = #tpu.pipeline_mode<synchronous>, transform_indices = @transform_4, window_bounds = array<i64: 1, 256>}, {transform_indices = @transform_5, window_bounds = array<i64: 4, 128, 128>}, {transform_indices = @transform_6, window_bounds = array<i64: 3, 128, 256>}, {transform_indices = @transform_7, window_bounds = array<i64: 128, 256>}]} {
    %c0 = arith.constant 0 : index
    %c0_0 = arith.constant 0 : index
    %0 = vector.load %arg2[%c0, %c0_0] : memref<128x256xbf16, #tpu.memory_space<vmem>>, vector<128x256xbf16>
    %c0_1 = arith.constant 0 : index
    %c0_2 = arith.constant 0 : index
    %1 = vector.load %arg3[%c0_1, %c0_2] : memref<256x128xbf16, #tpu.memory_space<vmem>>, vector<256x128xbf16>
    %c0_3 = arith.constant 0 : index
    %c0_4 = arith.constant 0 : index
    %2 = vector.load %arg4[%c0_3, %c0_4] : memref<1x128xf32, #tpu.memory_space<vmem>>, vector<1x128xf32>
    %3 = vector.shape_cast %2 : vector<1x128xf32> to vector<1x128xf32>
    %4 = vector.broadcast %3 : vector<1x128xf32> to vector<128x128xf32>
    %c0_5 = arith.constant 0 : index
    %c0_6 = arith.constant 0 : index
    %5 = vector.load %arg5[%c0_5, %c0_6] : memref<1x256xf32, #tpu.memory_space<vmem>>, vector<1x256xf32>
    %6 = vector.shape_cast %5 : vector<1x256xf32> to vector<1x256xf32>
    %7 = vector.broadcast %6 : vector<1x256xf32> to vector<128x256xf32>
    %c0_7 = arith.constant 0 : index
    %c0_8 = arith.constant 0 : index
    %8 = vector.load %arg1[%c0_7, %c0_8] : memref<128x256xf32, #tpu.memory_space<vmem>>, vector<128x256xf32>
    %c0_9 = arith.constant 0 : index
    %c0_10 = arith.constant 0 : index
    %c0_11 = arith.constant 0 : index
    %9 = vector.load %arg6[%c0_9, %c0_10, %c0_11] : memref<4x128x128xf32, #tpu.memory_space<vmem>>, vector<1x128x128xf32>
    %10 = vector.shape_cast %9 : vector<1x128x128xf32> to vector<128x128xf32>
    %11 = arith.truncf %8 : vector<128x256xf32> to vector<128x256xbf16>
    %cst = arith.constant dense<0.000000e+00> : vector<128x128xf32>
    %12 = tpu.matmul %11, %1, %cst {dimension_numbers = #tpu.dot_dimension_numbers<[1], [0], [0], [1], [0, 0, 1, 1], [], []>} : vector<128x256xbf16>, vector<256x128xbf16>, vector<128x128xf32> -> vector<128x128xf32>
    %13 = arith.addf %12, %4 : vector<128x128xf32>
    %14 = arith.negf %13 : vector<128x128xf32>
    %15 = math.exp %14 : vector<128x128xf32>
    %cst_12 = arith.constant 1.000000e+00 : f32
    %16 = vector.broadcast %cst_12 : f32 to vector<128x128xf32>
    %17 = arith.addf %16, %15 : vector<128x128xf32>
    %18 = arith.divf %16, %17 : vector<128x128xf32>
    %19 = arith.cmpf ogt, %18, %10 : vector<128x128xf32>
    %cst_13 = arith.constant 1.000000e+00 : f32
    %cst_14 = arith.constant 0.000000e+00 : f32
    %20 = vector.broadcast %cst_13 : f32 to vector<128x128xf32>
    %21 = vector.broadcast %cst_14 : f32 to vector<128x128xf32>
    %22 = arith.select %19, %20, %21 : vector<128x128xi1>, vector<128x128xf32>
    %c0_15 = arith.constant 0 : index
    %c0_16 = arith.constant 0 : index
    %c0_17 = arith.constant 0 : index
    %23 = vector.load %arg7[%c0_15, %c0_16, %c0_17] : memref<3x128x256xf32, #tpu.memory_space<vmem>>, vector<1x128x256xf32>
    %24 = vector.shape_cast %23 : vector<1x128x256xf32> to vector<128x256xf32>
    %25 = arith.truncf %22 : vector<128x128xf32> to vector<128x128xbf16>
    %cst_18 = arith.constant dense<0.000000e+00> : vector<128x256xf32>
    %26 = tpu.matmul %25, %0, %cst_18 {dimension_numbers = #tpu.dot_dimension_numbers<[1], [0], [0], [1], [0, 0, 1, 1], [], []>} : vector<128x128xbf16>, vector<128x256xbf16>, vector<128x256xf32> -> vector<128x256xf32>
    %27 = arith.addf %26, %7 : vector<128x256xf32>
    %28 = arith.negf %27 : vector<128x256xf32>
    %29 = math.exp %28 : vector<128x256xf32>
    %cst_19 = arith.constant 1.000000e+00 : f32
    %30 = vector.broadcast %cst_19 : f32 to vector<128x256xf32>
    %31 = arith.addf %30, %29 : vector<128x256xf32>
    %32 = arith.divf %30, %31 : vector<128x256xf32>
    %33 = arith.cmpf ogt, %32, %24 : vector<128x256xf32>
    %cst_20 = arith.constant 1.000000e+00 : f32
    %cst_21 = arith.constant 0.000000e+00 : f32
    %34 = vector.broadcast %cst_20 : f32 to vector<128x256xf32>
    %35 = vector.broadcast %cst_21 : f32 to vector<128x256xf32>
    %36 = arith.select %33, %34, %35 : vector<128x256xi1>, vector<128x256xf32>
    %c1 = arith.constant 1 : index
    %c0_22 = arith.constant 0 : index
    %c0_23 = arith.constant 0 : index
    %37 = vector.load %arg6[%c1, %c0_22, %c0_23] : memref<4x128x128xf32, #tpu.memory_space<vmem>>, vector<1x128x128xf32>
    %38 = vector.shape_cast %37 : vector<1x128x128xf32> to vector<128x128xf32>
    %39 = arith.truncf %36 : vector<128x256xf32> to vector<128x256xbf16>
    %cst_24 = arith.constant dense<0.000000e+00> : vector<128x128xf32>
    %40 = tpu.matmul %39, %1, %cst_24 {dimension_numbers = #tpu.dot_dimension_numbers<[1], [0], [0], [1], [0, 0, 1, 1], [], []>} : vector<128x256xbf16>, vector<256x128xbf16>, vector<128x128xf32> -> vector<128x128xf32>
    %41 = arith.addf %40, %4 : vector<128x128xf32>
    %42 = arith.negf %41 : vector<128x128xf32>
    %43 = math.exp %42 : vector<128x128xf32>
    %cst_25 = arith.constant 1.000000e+00 : f32
    %44 = vector.broadcast %cst_25 : f32 to vector<128x128xf32>
    %45 = arith.addf %44, %43 : vector<128x128xf32>
    %46 = arith.divf %44, %45 : vector<128x128xf32>
    %47 = arith.cmpf ogt, %46, %38 : vector<128x128xf32>
    %cst_26 = arith.constant 1.000000e+00 : f32
    %cst_27 = arith.constant 0.000000e+00 : f32
    %48 = vector.broadcast %cst_26 : f32 to vector<128x128xf32>
    %49 = vector.broadcast %cst_27 : f32 to vector<128x128xf32>
    %50 = arith.select %47, %48, %49 : vector<128x128xi1>, vector<128x128xf32>
    %c1_28 = arith.constant 1 : index
    %c0_29 = arith.constant 0 : index
    %c0_30 = arith.constant 0 : index
    %51 = vector.load %arg7[%c1_28, %c0_29, %c0_30] : memref<3x128x256xf32, #tpu.memory_space<vmem>>, vector<1x128x256xf32>
    %52 = vector.shape_cast %51 : vector<1x128x256xf32> to vector<128x256xf32>
    %53 = arith.truncf %50 : vector<128x128xf32> to vector<128x128xbf16>
    %cst_31 = arith.constant dense<0.000000e+00> : vector<128x256xf32>
    %54 = tpu.matmul %53, %0, %cst_31 {dimension_numbers = #tpu.dot_dimension_numbers<[1], [0], [0], [1], [0, 0, 1, 1], [], []>} : vector<128x128xbf16>, vector<128x256xbf16>, vector<128x256xf32> -> vector<128x256xf32>
    %55 = arith.addf %54, %7 : vector<128x256xf32>
    %56 = arith.negf %55 : vector<128x256xf32>
    %57 = math.exp %56 : vector<128x256xf32>
    %cst_32 = arith.constant 1.000000e+00 : f32
    %58 = vector.broadcast %cst_32 : f32 to vector<128x256xf32>
    %59 = arith.addf %58, %57 : vector<128x256xf32>
    %60 = arith.divf %58, %59 : vector<128x256xf32>
    %61 = arith.cmpf ogt, %60, %52 : vector<128x256xf32>
    %cst_33 = arith.constant 1.000000e+00 : f32
    %cst_34 = arith.constant 0.000000e+00 : f32
    %62 = vector.broadcast %cst_33 : f32 to vector<128x256xf32>
    %63 = vector.broadcast %cst_34 : f32 to vector<128x256xf32>
    %64 = arith.select %61, %62, %63 : vector<128x256xi1>, vector<128x256xf32>
    %c2 = arith.constant 2 : index
    %c0_35 = arith.constant 0 : index
    %c0_36 = arith.constant 0 : index
    %65 = vector.load %arg6[%c2, %c0_35, %c0_36] : memref<4x128x128xf32, #tpu.memory_space<vmem>>, vector<1x128x128xf32>
    %66 = vector.shape_cast %65 : vector<1x128x128xf32> to vector<128x128xf32>
    %67 = arith.truncf %64 : vector<128x256xf32> to vector<128x256xbf16>
    %cst_37 = arith.constant dense<0.000000e+00> : vector<128x128xf32>
    %68 = tpu.matmul %67, %1, %cst_37 {dimension_numbers = #tpu.dot_dimension_numbers<[1], [0], [0], [1], [0, 0, 1, 1], [], []>} : vector<128x256xbf16>, vector<256x128xbf16>, vector<128x128xf32> -> vector<128x128xf32>
    %69 = arith.addf %68, %4 : vector<128x128xf32>
    %70 = arith.negf %69 : vector<128x128xf32>
    %71 = math.exp %70 : vector<128x128xf32>
    %cst_38 = arith.constant 1.000000e+00 : f32
    %72 = vector.broadcast %cst_38 : f32 to vector<128x128xf32>
    %73 = arith.addf %72, %71 : vector<128x128xf32>
    %74 = arith.divf %72, %73 : vector<128x128xf32>
    %75 = arith.cmpf ogt, %74, %66 : vector<128x128xf32>
    %cst_39 = arith.constant 1.000000e+00 : f32
    %cst_40 = arith.constant 0.000000e+00 : f32
    %76 = vector.broadcast %cst_39 : f32 to vector<128x128xf32>
    %77 = vector.broadcast %cst_40 : f32 to vector<128x128xf32>
    %78 = arith.select %75, %76, %77 : vector<128x128xi1>, vector<128x128xf32>
    %c2_41 = arith.constant 2 : index
    %c0_42 = arith.constant 0 : index
    %c0_43 = arith.constant 0 : index
    %79 = vector.load %arg7[%c2_41, %c0_42, %c0_43] : memref<3x128x256xf32, #tpu.memory_space<vmem>>, vector<1x128x256xf32>
    %80 = vector.shape_cast %79 : vector<1x128x256xf32> to vector<128x256xf32>
    %81 = arith.truncf %78 : vector<128x128xf32> to vector<128x128xbf16>
    %cst_44 = arith.constant dense<0.000000e+00> : vector<128x256xf32>
    %82 = tpu.matmul %81, %0, %cst_44 {dimension_numbers = #tpu.dot_dimension_numbers<[1], [0], [0], [1], [0, 0, 1, 1], [], []>} : vector<128x128xbf16>, vector<128x256xbf16>, vector<128x256xf32> -> vector<128x256xf32>
    %83 = arith.addf %82, %7 : vector<128x256xf32>
    %84 = arith.negf %83 : vector<128x256xf32>
    %85 = math.exp %84 : vector<128x256xf32>
    %cst_45 = arith.constant 1.000000e+00 : f32
    %86 = vector.broadcast %cst_45 : f32 to vector<128x256xf32>
    %87 = arith.addf %86, %85 : vector<128x256xf32>
    %88 = arith.divf %86, %87 : vector<128x256xf32>
    %89 = arith.cmpf ogt, %88, %80 : vector<128x256xf32>
    %cst_46 = arith.constant 1.000000e+00 : f32
    %cst_47 = arith.constant 0.000000e+00 : f32
    %90 = vector.broadcast %cst_46 : f32 to vector<128x256xf32>
    %91 = vector.broadcast %cst_47 : f32 to vector<128x256xf32>
    %92 = arith.select %89, %90, %91 : vector<128x256xi1>, vector<128x256xf32>
    %c0_48 = arith.constant 0 : index
    %c0_49 = arith.constant 0 : index
    %93 = vector.load %arg8[%c0_48, %c0_49] : memref<128x256xf32, #tpu.memory_space<vmem>>, vector<128x256xf32>
    tpu.vector_store %arg8[%c0_48, %c0_49], %92 {strides = array<i32>} : memref<128x256xf32, #tpu.memory_space<vmem>>, vector<128x256xf32>,
    return
  }
  func.func @transform_0(%arg0: i32) -> (i32, i32) {
    %c0_i32 = arith.constant 0 : i32
    %c0_i32_0 = arith.constant 0 : i32
    return %arg0, %c0_i32 : i32, i32
  }
  func.func @transform_1(%arg0: i32) -> (i32, i32) {
    %c0_i32 = arith.constant 0 : i32
    %c0_i32_0 = arith.constant 0 : i32
    %c0_i32_1 = arith.constant 0 : i32
    return %c0_i32, %c0_i32_0 : i32, i32
  }
  func.func @transform_2(%arg0: i32) -> (i32, i32) {
    %c0_i32 = arith.constant 0 : i32
    %c0_i32_0 = arith.constant 0 : i32
    %c0_i32_1 = arith.constant 0 : i32
    return %c0_i32, %c0_i32_0 : i32, i32
  }
  func.func @transform_3(%arg0: i32) -> (i32, i32) {
    %c0_i32 = arith.constant 0 : i32
    %c0_i32_0 = arith.constant 0 : i32
    %c0_i32_1 = arith.constant 0 : i32
    return %c0_i32, %c0_i32_0 : i32, i32
  }
  func.func @transform_4(%arg0: i32) -> (i32, i32) {
    %c0_i32 = arith.constant 0 : i32
    %c0_i32_0 = arith.constant 0 : i32
    %c0_i32_1 = arith.constant 0 : i32
    return %c0_i32, %c0_i32_0 : i32, i32
  }
  func.func @transform_5(%arg0: i32) -> (i32, i32, i32) {
    %c0_i32 = arith.constant 0 : i32
    %c0_i32_0 = arith.constant 0 : i32
    %c0_i32_1 = arith.constant 0 : i32
    return %c0_i32, %arg0, %c0_i32_0 : i32, i32, i32
  }
  func.func @transform_6(%arg0: i32) -> (i32, i32, i32) {
    %c0_i32 = arith.constant 0 : i32
    %c0_i32_0 = arith.constant 0 : i32
    %c0_i32_1 = arith.constant 0 : i32
    return %c0_i32, %arg0, %c0_i32_0 : i32, i32, i32
  }
  func.func @transform_7(%arg0: i32) -> (i32, i32) {
    %c0_i32 = arith.constant 0 : i32
    %c0_i32_0 = arith.constant 0 : i32
    return %arg0, %c0_i32 : i32, i32
  }
}

</mosaic_0001>

<llo_original>
// kernel: tpu_custom_call.1
$region0: #{tpu_custom_call.1}
  #allocation0 [shape = 'u32[]', space=smem, size = 0x4, offset = 0x4, fixed_abs, tag = 'smem constant byte address 0x4 - core index']
  #allocation1 [shape = 'u32[144,128]{1,0:T(1,128)}', space=vmem, size = 0x12000, scoped, tag = 'internal scratch']
  #allocation12 [shape = 's32[]', space=sflag, size = 0x4, offset = 0, fixed_abs, tag = 'sflag constant byte address 0x0 - dummy sync flag']
  #allocation14 [shape = 's32[]', space=sflag, size = 0x4, offset = 0, fixed_abs, tag = 'sflag constant byte address 0x0 - dummy sync flag']
  %s0 = inlined_call_operand.hbm [shape: f32[256,256], index: 0, kind: input, shape index: {}]
  %s1 = inlined_call_operand.hbm [shape: bf16[128,256], index: 1, kind: input, shape index: {}]
  %s2 = inlined_call_operand.hbm [shape: bf16[256,128], index: 2, kind: input, shape index: {}]
  %s3 = inlined_call_operand.vmem [shape: f32[1,128], index: 3, kind: input, shape index: {}]
  %s4 = inlined_call_operand.vmem [shape: f32[1,256], index: 4, kind: input, shape index: {}]
  %s5 = inlined_call_operand.hbm [shape: f32[4,256,128], index: 5, kind: input, shape index: {}]
  %s6 = inlined_call_operand.hbm [shape: f32[3,256,256], index: 6, kind: input, shape index: {}]
  %s7 = inlined_call_operand.hbm [shape: f32[256,256], index: 7, kind: output, shape index: {}]
  %s8 = sld [smem:[#allocation0]]
  $region81: #{tpu_custom_call.1} parent=0
    _
  %s10 = ssub.s32 1, %s8
  %s11 = scalar_select 0, %s10, %s8
  $region1: #{tpu_custom_call.1} parent=0
    #allocation2 [shape = 'u8[262144]{0}', space=vmem, size = 0x40000, scoped, tag = 'input window, operand 0']
    #allocation3 [shape = 's32[2]{0}', space=sflag, size = 0x8, scoped, tag = 'scoped memory for tpu_custom_call.1']
    #allocation4 [shape = 's32[2]{0}', space=sflag, size = 0x8, scoped, tag = 'scoped memory for tpu_custom_call.1']
    #allocation5 [shape = 'u8[65536]{0}', space=vmem, size = 0x10000, scoped, tag = 'input window, operand 1, single buffered']
    #allocation6 [shape = 's32[1]{0}', space=sflag, size = 0x4, scoped, tag = 'scoped memory for tpu_custom_call.1']
    #allocation7 [shape = 'u8[65536]{0}', space=vmem, size = 0x10000, scoped, tag = 'input window, operand 2, single buffered']
    #allocation8 [shape = 'u8[524288]{0}', space=vmem, size = 0x80000, scoped, tag = 'input window, operand 5']
    #allocation9 [shape = 's32[2]{0}', space=sflag, size = 0x8, scoped, tag = 'scoped memory for tpu_custom_call.1']
    #allocation10 [shape = 'u8[786432]{0}', space=vmem, size = 0xc0000, scoped, tag = 'input window, operand 6']
    #allocation11 [shape = 'u8[262144]{0}', space=vmem, size = 0x40000, scoped, tag = 'output window, operand 0']
    %12 = vsyncpa [#allocation3], 0
    %s13 = scalar_lea.sflag [#allocation3], 1
    %14 = vsyncpa %s13, 0
    %15 = vsyncpa [#allocation6], 0
    %16 = vsyncpa [#allocation9], 0
    %s17 = scalar_lea.sflag [#allocation9], 1
    %18 = vsyncpa %s17, 0
    %19 = vsyncpa [#allocation4], 0
    %s20 = scalar_lea.sflag [#allocation4], 1
    %21 = vsyncpa %s20, 0
    loop: start=0, step=1, limit=4
    $region2: #{tpu_custom_call.1} parent=1 // loop_pre_header
      _
    $region3: #{tpu_custom_call.1} parent=1 // loop_header
      %s23 = sphi 0, %s27
      %p24 = scmp.ge.s32.totalorder %s23, 4
      %s33 = sphi 0, %s35
      %s36 = sphi 0, %s33
      %s37 = sphi 0, %s36
      %s53 = sphi 0, %s37
      %s57 = sphi 0, %s57
      %s59 = sphi 0, %s57
      %s60 = sphi 0, %s59
      %s74 = sphi 0, %s60
      %s78 = sphi 0, %s78
      %s80 = sphi 0, %s78
      %s81 = sphi 0, %s80
      %s95 = sphi 0, %s81
      %s99 = sphi 0, %s99
      %s101 = sphi 0, %s99
      %s102 = sphi 0, %s101
      %s116 = sphi 0, %s102
      %s120 = sphi 0, %s120
      %s122 = sphi 0, %s120
      %s123 = sphi 0, %s122
      %s137 = sphi 0, %s123
      %s143 = sphi 0, %s145
      %s146 = sphi 0, %s143
      %s147 = sphi 0, %s146
      %s163 = sphi 0, %s147
      %s169 = sphi 0, %s171
      %s172 = sphi 0, %s169
      %s173 = sphi 0, %s172
      %s189 = sphi 0, %s173
      %s195 = sphi 0, %s197
      %s198 = sphi 0, %s195
      %s199 = sphi 0, %s198
      %s215 = sphi 0, %s199
    $region4: #{tpu_custom_call.1} parent=1 // loop_header_branch
      %26 = sbr.rel (%p24) target = $region8
    $region5: #{tpu_custom_call.1} parent=1 // loop_body
      %s28 = ssub.s32 %s23, 1
      %s29 = ssub.s32 %s23, 2
      %s30 = sadd.s32 %s23, 1
      %s31 = ssub.s32 %s23, %s30
      %p32 = scmp.eq.s32.totalorder %s31, 0
      %s34 = sadd.s32 %s33, 1
      %s35 = scalar_select %p32, %s33, %s34
      %p38 = pneg %p32
      %p39 = scmp.eq.s32.totalorder %s23, 1
      %p40 = por %p38, %p39
      %p41 = scmp.ne.s32.totalorder %s33, %s36
      %p42 = scmp.eq.s32.totalorder %s23, 0
      %p43 = por %p41, %p42
      %p44 = scmp.ne.s32.totalorder %s33, %s36
      %p45 = scmp.eq.s32.totalorder %s28, 1
      %p46 = por %p44, %p45
      %p47 = scmp.ne.s32.totalorder %s36, %s37
      %p48 = scmp.eq.s32.totalorder %s28, 0
      %p49 = por %p47, %p48
      %p50 = scmp.ne.s32.totalorder %s36, %s37
      %p51 = scmp.eq.s32.totalorder %s29, 1
      %p52 = por %p50, %p51
      %p54 = scmp.ne.s32.totalorder %s37, %s53
      %p55 = scmp.eq.s32.totalorder %s29, 0
      %p56 = por %p54, %p55
      %s58 = sadd.s32 %s57, 1
      %p61 = scmp.eq.s32.totalorder %s23, 1
      %p62 = scmp.ne.s32.totalorder %s57, %s59
      %p63 = scmp.eq.s32.totalorder %s23, 0
      %p64 = por %p62, %p63
      %p65 = scmp.ne.s32.totalorder %s57, %s59
      %p66 = scmp.eq.s32.totalorder %s28, 1
      %p67 = por %p65, %p66
      %p68 = scmp.ne.s32.totalorder %s59, %s60
      %p69 = scmp.eq.s32.totalorder %s28, 0
      %p70 = por %p68, %p69
      %p71 = scmp.ne.s32.totalorder %s59, %s60
      %p72 = scmp.eq.s32.totalorder %s29, 1
      %p73 = por %p71, %p72
      %p75 = scmp.ne.s32.totalorder %s60, %s74
      %p76 = scmp.eq.s32.totalorder %s29, 0
      %p77 = por %p75, %p76
      %s79 = sadd.s32 %s78, 1
      %p82 = scmp.eq.s32.totalorder %s23, 1
      %p83 = scmp.ne.s32.totalorder %s78, %s80
      %p84 = scmp.eq.s32.totalorder %s23, 0
      %p85 = por %p83, %p84
      %p86 = scmp.ne.s32.totalorder %s78, %s80
      %p87 = scmp.eq.s32.totalorder %s28, 1
      %p88 = por %p86, %p87
      %p89 = scmp.ne.s32.totalorder %s80, %s81
      %p90 = scmp.eq.s32.totalorder %s28, 0
      %p91 = por %p89, %p90
      %p92 = scmp.ne.s32.totalorder %s80, %s81
      %p93 = scmp.eq.s32.totalorder %s29, 1
      %p94 = por %p92, %p93
      %p96 = scmp.ne.s32.totalorder %s81, %s95
      %p97 = scmp.eq.s32.totalorder %s29, 0
      %p98 = por %p96, %p97
      %s100 = sadd.s32 %s99, 1
      %p103 = scmp.eq.s32.totalorder %s23, 1
      %p104 = scmp.ne.s32.totalorder %s99, %s101
      %p105 = scmp.eq.s32.totalorder %s23, 0
      %p106 = por %p104, %p105
      %p107 = scmp.ne.s32.totalorder %s99, %s101
      %p108 = scmp.eq.s32.totalorder %s28, 1
      %p109 = por %p107, %p108
      %p110 = scmp.ne.s32.totalorder %s101, %s102
      %p111 = scmp.eq.s32.totalorder %s28, 0
      %p112 = por %p110, %p111
      %p113 = scmp.ne.s32.totalorder %s101, %s102
      %p114 = scmp.eq.s32.totalorder %s29, 1
      %p115 = por %p113, %p114
      %p117 = scmp.ne.s32.totalorder %s102, %s116
      %p118 = scmp.eq.s32.totalorder %s29, 0
      %p119 = por %p117, %p118
      %s121 = sadd.s32 %s120, 1
      %p124 = scmp.eq.s32.totalorder %s23, 1
      %p125 = scmp.ne.s32.totalorder %s120, %s122
      %p126 = scmp.eq.s32.totalorder %s23, 0
      %p127 = por %p125, %p126
      %p128 = scmp.ne.s32.totalorder %s120, %s122
      %p129 = scmp.eq.s32.totalorder %s28, 1
      %p130 = por %p128, %p129
      %p131 = scmp.ne.s32.totalorder %s122, %s123
      %p132 = scmp.eq.s32.totalorder %s28, 0
      %p133 = por %p131, %p132
      %p134 = scmp.ne.s32.totalorder %s122, %s123
      %p135 = scmp.eq.s32.totalorder %s29, 1
      %p136 = por %p134, %p135
      %p138 = scmp.ne.s32.totalorder %s123, %s137
      %p139 = scmp.eq.s32.totalorder %s29, 0
      %p140 = por %p138, %p139
      %s141 = ssub.s32 %s23, %s30
      %p142 = scmp.eq.s32.totalorder %s141, 0
      %s144 = sadd.s32 %s143, 1
      %s145 = scalar_select %p142, %s143, %s144
      %p148 = pneg %p142
      %p149 = scmp.eq.s32.totalorder %s23, 1
      %p150 = por %p148, %p149
      %p151 = scmp.ne.s32.totalorder %s143, %s146
      %p152 = scmp.eq.s32.totalorder %s23, 0
      %p153 = por %p151, %p152
      %p154 = scmp.ne.s32.totalorder %s143, %s146
      %p155 = scmp.eq.s32.totalorder %s28, 1
      %p156 = por %p154, %p155
      %p157 = scmp.ne.s32.totalorder %s146, %s147
      %p158 = scmp.eq.s32.totalorder %s28, 0
      %p159 = por %p157, %p158
      %p160 = scmp.ne.s32.totalorder %s146, %s147
      %p161 = scmp.eq.s32.totalorder %s29, 1
      %p162 = por %p160, %p161
      %p164 = scmp.ne.s32.totalorder %s147, %s163
      %p165 = scmp.eq.s32.totalorder %s29, 0
      %p166 = por %p164, %p165
      %s167 = ssub.s32 %s23, %s30
      %p168 = scmp.eq.s32.totalorder %s167, 0
      %s170 = sadd.s32 %s169, 1
      %s171 = scalar_select %p168, %s169, %s170
      %p174 = pneg %p168
      %p175 = scmp.eq.s32.totalorder %s23, 1
      %p176 = por %p174, %p175
      %p177 = scmp.ne.s32.totalorder %s169, %s172
      %p178 = scmp.eq.s32.totalorder %s23, 0
      %p179 = por %p177, %p178
      %p180 = scmp.ne.s32.totalorder %s169, %s172
      %p181 = scmp.eq.s32.totalorder %s28, 1
      %p182 = por %p180, %p181
      %p183 = scmp.ne.s32.totalorder %s172, %s173
      %p184 = scmp.eq.s32.totalorder %s28, 0
      %p185 = por %p183, %p184
      %p186 = scmp.ne.s32.totalorder %s172, %s173
      %p187 = scmp.eq.s32.totalorder %s29, 1
      %p188 = por %p186, %p187
      %p190 = scmp.ne.s32.totalorder %s173, %s189
      %p191 = scmp.eq.s32.totalorder %s29, 0
      %p192 = por %p190, %p191
      %s193 = ssub.s32 %s23, %s30
      %p194 = scmp.eq.s32.totalorder %s193, 0
      %s196 = sadd.s32 %s195, 1
      %s197 = scalar_select %p194, %s195, %s196
      %p200 = pneg %p194
      %p201 = scmp.eq.s32.totalorder %s23, 1
      %p202 = por %p200, %p201
      %p203 = scmp.ne.s32.totalorder %s195, %s198
      %p204 = scmp.eq.s32.totalorder %s23, 0
      %p205 = por %p203, %p204
      %p206 = scmp.ne.s32.totalorder %s195, %s198
      %p207 = scmp.eq.s32.totalorder %s28, 1
      %p208 = por %p206, %p207
      %p209 = scmp.ne.s32.totalorder %s198, %s199
      %p210 = scmp.eq.s32.totalorder %s28, 0
      %p211 = por %p209, %p210
      %p212 = scmp.ne.s32.totalorder %s198, %s199
      %p213 = scmp.eq.s32.totalorder %s29, 1
      %p214 = por %p212, %p213
      %p216 = scmp.ne.s32.totalorder %s199, %s215
      %p217 = scmp.eq.s32.totalorder %s29, 0
      %p218 = por %p216, %p217
      %p219 = scmp.le.s32.totalorder 1, %s23
      %p220 = scmp.lt.s32.totalorder %s23, 3
      %p221 = pnand %p219, %p220
      %p222 = pneg %p221
      // Predicated region
      $region9: #{tpu_custom_call.1} parent=5 // pred_check
        _
      $region10: #{tpu_custom_call.1} parent=5 // pred_check_branch
        %224 = sbr.rel (%p221) target = $region12
      $region11: #{tpu_custom_call.1} parent=5 // pred_region
        %s225 = ssub.s32 %s23, 1
        // Predicated region
        $region13: #{tpu_custom_call.1} parent=11 // pred_check
          %p226 = pneg %p70
        $region14: #{tpu_custom_call.1} parent=11 // pred_check_branch
          %228 = sbr.rel (%p226) target = $region16
        $region15: #{tpu_custom_call.1} parent=11 // pred_region
          %s230 = ssub.s32 2048, 2048
          %231 = vsyncadd [#allocation6], %s230
          %s232 = sshll.u32 [#allocation5], 4
          %s233 = int_to_ptr.vmem [resolvable:$true] %s232
          %238 = dma.hbm_to_vmem [thread:$0]  %s1, 2048, %s233, [#allocation6], 128, 128, 8
        $region16: #{tpu_custom_call.1} parent=11 // pred_fallthru
          _
        // Predicated region
        $region17: #{tpu_custom_call.1} parent=11 // pred_check
          %p239 = pneg %p91
        $region18: #{tpu_custom_call.1} parent=11 // pred_check_branch
          %241 = sbr.rel (%p239) target = $region20
        $region19: #{tpu_custom_call.1} parent=11 // pred_region
          %s243 = ssub.s32 2048, 2048
          %244 = vsyncadd [#allocation6], %s243
          %s245 = sshll.u32 [#allocation7], 4
          %s246 = int_to_ptr.vmem [resolvable:$true] %s245
          %251 = dma.hbm_to_vmem [thread:$0]  %s2, 2048, %s246, [#allocation6], 64, 64, 4
        $region20: #{tpu_custom_call.1} parent=11 // pred_fallthru
          _
        // Predicated region
        $region21: #{tpu_custom_call.1} parent=11 // pred_check
          %p252 = pneg %p112
        $region22: #{tpu_custom_call.1} parent=11 // pred_check_branch
          %254 = sbr.rel (%p252) target = $region24
        $region23: #{tpu_custom_call.1} parent=11 // pred_region
          _
        $region24: #{tpu_custom_call.1} parent=11 // pred_fallthru
          _
        // Predicated region
        $region25: #{tpu_custom_call.1} parent=11 // pred_check
          %p255 = pneg %p133
        $region26: #{tpu_custom_call.1} parent=11 // pred_check_branch
          %257 = sbr.rel (%p255) target = $region28
        $region27: #{tpu_custom_call.1} parent=11 // pred_region
          _
        $region28: #{tpu_custom_call.1} parent=11 // pred_fallthru
          _
      $region12: #{tpu_custom_call.1} parent=5 // pred_fallthru
        _
      %p258 = scmp.lt.s32.totalorder %s23, 2
      // Predicated region
      $region29: #{tpu_custom_call.1} parent=5 // pred_check
        %p259 = pneg %p258
      $region30: #{tpu_custom_call.1} parent=5 // pred_check_branch
        %261 = sbr.rel (%p259) target = $region32
      $region31: #{tpu_custom_call.1} parent=5 // pred_region
        // Predicated region
        $region33: #{tpu_custom_call.1} parent=31 // pred_check
          %p262 = pneg %p43
        $region34: #{tpu_custom_call.1} parent=31 // pred_check_branch
          %264 = sbr.rel (%p262) target = $region36
        $region35: #{tpu_custom_call.1} parent=31 // pred_region
          %s265 = sand.u32 %s33, 1
          %s266 = scalar_lea.sflag [#allocation3], %s265
          %s267 = sand.u32 %s33, 1
          %s268 = smul.addr %s267, 256
          %s269 = scalar_lea.vmem [#allocation2], %s268
          %s270 = smul.u32 16, %s23
          %s272 = ssub.s32 4096, 4096
          %273 = vsyncadd %s266, %s272
          %s274 = smul.addr %s270, 2
          %s275 = smul.addr %s274, 128
          %s276 = scalar_lea.hbm %s0, %s275
          %s277 = sshll.u32 %s269, 4
          %s278 = int_to_ptr.vmem [resolvable:$true] %s277
          %283 = dma.hbm_to_vmem [thread:$0]  %s276, 4096, %s278, %s266, 256, 256, 16
        $region36: #{tpu_custom_call.1} parent=31 // pred_fallthru
          _
        // Predicated region
        $region37: #{tpu_custom_call.1} parent=31 // pred_check
          %p284 = pneg %p153
        $region38: #{tpu_custom_call.1} parent=31 // pred_check_branch
          %286 = sbr.rel (%p284) target = $region40
        $region39: #{tpu_custom_call.1} parent=31 // pred_region
          #allocation13 [shape = 'u32[6]{0}', space=smem, size = 0x18, scoped, tag = 'DMA stride descriptor']
          %s287 = sand.u32 %s23, 1
          %s288 = scalar_lea.sflag [#allocation9], %s287
          %s289 = sand.u32 %s143, 1
          %s290 = smul.addr %s289, 512
          %s291 = scalar_lea.vmem [#allocation8], %s290
          %s292 = smul.u32 16, %s23
          %s294 = ssub.s32 8192, 8192
          %295 = vsyncadd %s288, %s294
          %s296 = smul.addr %s292, 128
          %s297 = scalar_lea.hbm %s5, %s296
          %s299 = sshll.u32 1, 14
          %s300 = sxor.u32 4294967295, %s299
          %s302 = sld [smem:[#allocation0]]
          %s303 = sadd.s32 2, %s302
          %s305 = sshll.u32 7, 26
          %s306 = sxor.u32 4294967295, %s305
          %s307 = sand.u32 0, %s306
          %s308 = sshll.u32 %s303, 26
          %s309 = sor.u32 %s307, %s308
          %s310 = sshll.u32 %s291, 4
          %s311 = int_to_ptr.vmem [resolvable:$true] %s310
          %317 = sst [smem:[#allocation13]] 4096
          %s318 = scalar_lea.smem [#allocation13], 1
          %319 = sst [smem:[%s318]] 2048
          %s320 = scalar_lea.smem [#allocation13], 2
          %321 = sst [smem:[%s320]] 16
          %s322 = scalar_lea.smem [#allocation13], 3
          %323 = sst [smem:[%s322]] 128
          %s324 = scalar_lea.smem [#allocation13], 4
          %325 = sst [smem:[%s324]] 128
          %s326 = scalar_lea.smem [#allocation13], 5
          %327 = sst [smem:[%s326]] 8
          %329 = dma.general %s297, 8192, %s311, %s288, 131072, [#allocation13], %s309, 0
        $region40: #{tpu_custom_call.1} parent=31 // pred_fallthru
          _
        // Predicated region
        $region41: #{tpu_custom_call.1} parent=31 // pred_check
          %p330 = pneg %p179
        $region42: #{tpu_custom_call.1} parent=31 // pred_check_branch
          %332 = sbr.rel (%p330) target = $region44
        $region43: #{tpu_custom_call.1} parent=31 // pred_region
          #allocation15 [shape = 'u32[6]{0}', space=smem, size = 0x18, scoped, tag = 'DMA stride descriptor']
          %s333 = sand.u32 %s23, 1
          %s334 = scalar_lea.sflag [#allocation9], %s333
          %s335 = sand.u32 %s169, 1
          %s336 = smul.addr %s335, 768
          %s337 = scalar_lea.vmem [#allocation10], %s336
          %s338 = smul.u32 16, %s23
          %s340 = ssub.s32 12288, 12288
          %341 = vsyncadd %s334, %s340
          %s342 = smul.addr %s338, 2
          %s343 = smul.addr %s342, 128
          %s344 = scalar_lea.hbm %s6, %s343
          %s346 = sshll.u32 1, 14
          %s347 = sxor.u32 4294967295, %s346
          %s349 = sld [smem:[#allocation0]]
          %s350 = sadd.s32 2, %s349
          %s352 = sshll.u32 7, 26
          %s353 = sxor.u32 4294967295, %s352
          %s354 = sand.u32 0, %s353
          %s355 = sshll.u32 %s350, 26
          %s356 = sor.u32 %s354, %s355
          %s357 = sshll.u32 %s337, 4
          %s358 = int_to_ptr.vmem [resolvable:$true] %s357
          %364 = sst [smem:[#allocation15]] 8192
          %s365 = scalar_lea.smem [#allocation15], 1
          %366 = sst [smem:[%s365]] 4096
          %s367 = scalar_lea.smem [#allocation15], 2
          %368 = sst [smem:[%s367]] 16
          %s369 = scalar_lea.smem [#allocation15], 3
          %370 = sst [smem:[%s369]] 256
          %s371 = scalar_lea.smem [#allocation15], 4
          %372 = sst [smem:[%s371]] 256
          %s373 = scalar_lea.smem [#allocation15], 5
          %374 = sst [smem:[%s373]] 16
          %376 = dma.general %s344, 12288, %s358, %s334, 131072, [#allocation15], %s356, 0
        $region44: #{tpu_custom_call.1} parent=31 // pred_fallthru
          _
      $region32: #{tpu_custom_call.1} parent=5 // pred_fallthru
        _
      %p377 = scmp.le.s32.totalorder 1, %s23
      %p378 = scmp.lt.s32.totalorder %s23, 3
      %p379 = pnand %p377, %p378
      %p380 = pneg %p379
      // Predicated region
      $region45: #{tpu_custom_call.1} parent=5 // pred_check
        _
      $region46: #{tpu_custom_call.1} parent=5 // pred_check_branch
        %382 = sbr.rel (%p379) target = $region48
      $region47: #{tpu_custom_call.1} parent=5 // pred_region
        %s383 = ssub.s32 %s23, 1
        %s384 = sand.u32 %s36, 1
        %s385 = scalar_lea.sflag [#allocation3], %s384
        %s386 = sand.u32 %s36, 1
        %s387 = smul.addr %s386, 256
        %s388 = scalar_lea.vmem [#allocation2], %s387
        // Predicated region
        $region49: #{tpu_custom_call.1} parent=47 // pred_check
          %p389 = pneg %p49
        $region50: #{tpu_custom_call.1} parent=47 // pred_check_branch
          %391 = sbr.rel (%p389) target = $region52
        $region51: #{tpu_custom_call.1} parent=47 // pred_region
          %392 = dma.done %s385, 4096
        $region52: #{tpu_custom_call.1} parent=47 // pred_fallthru
          _
        // Predicated region
        $region53: #{tpu_custom_call.1} parent=47 // pred_check
          %p393 = pneg %p70
        $region54: #{tpu_custom_call.1} parent=47 // pred_check_branch
          %395 = sbr.rel (%p393) target = $region56
        $region55: #{tpu_custom_call.1} parent=47 // pred_region
          %396 = dma.done [#allocation6], 2048
        $region56: #{tpu_custom_call.1} parent=47 // pred_fallthru
          _
        // Predicated region
        $region57: #{tpu_custom_call.1} parent=47 // pred_check
          %p397 = pneg %p91
        $region58: #{tpu_custom_call.1} parent=47 // pred_check_branch
          %399 = sbr.rel (%p397) target = $region60
        $region59: #{tpu_custom_call.1} parent=47 // pred_region
          %400 = dma.done [#allocation6], 2048
        $region60: #{tpu_custom_call.1} parent=47 // pred_fallthru
          _
        %s401 = sand.u32 %s28, 1
        %s402 = scalar_lea.sflag [#allocation9], %s401
        %s403 = sand.u32 %s146, 1
        %s404 = smul.addr %s403, 512
        %s405 = scalar_lea.vmem [#allocation8], %s404
        // Predicated region
        $region61: #{tpu_custom_call.1} parent=47 // pred_check
          %p406 = pneg %p159
        $region62: #{tpu_custom_call.1} parent=47 // pred_check_branch
          %408 = sbr.rel (%p406) target = $region64
        $region63: #{tpu_custom_call.1} parent=47 // pred_region
          %409 = dma.done %s402, 8192
        $region64: #{tpu_custom_call.1} parent=47 // pred_fallthru
          _
        %s410 = sand.u32 %s28, 1
        %s411 = scalar_lea.sflag [#allocation9], %s410
        %s412 = sand.u32 %s172, 1
        %s413 = smul.addr %s412, 768
        %s414 = scalar_lea.vmem [#allocation10], %s413
        // Predicated region
        $region65: #{tpu_custom_call.1} parent=47 // pred_check
          %p415 = pneg %p185
        $region66: #{tpu_custom_call.1} parent=47 // pred_check_branch
          %417 = sbr.rel (%p415) target = $region68
        $region67: #{tpu_custom_call.1} parent=47 // pred_region
          %418 = dma.done %s411, 12288
        $region68: #{tpu_custom_call.1} parent=47 // pred_fallthru
          _
        %s419 = sand.u32 %s36, 1
        %s420 = scalar_lea.sflag [#allocation3], %s419
        %s421 = sand.u32 %s36, 1
        %s422 = smul.addr %s421, 256
        %s423 = scalar_lea.vmem [#allocation2], %s422
        %p424 = pneg %p49
        %p425 = pneg %p46
        %p426 = pneg %p70
        %p427 = pneg %p67
        %p428 = pneg %p91
        %p429 = pneg %p88
        %p430 = pneg %p112
        %p431 = pneg %p109
        %p432 = pneg %p133
        %p433 = pneg %p130
        %s434 = sand.u32 %s28, 1
        %s435 = scalar_lea.sflag [#allocation9], %s434
        %s436 = sand.u32 %s146, 1
        %s437 = smul.addr %s436, 512
        %s438 = scalar_lea.vmem [#allocation8], %s437
        %p439 = pneg %p159
        %p440 = pneg %p156
        %s441 = sand.u32 %s28, 1
        %s442 = scalar_lea.sflag [#allocation9], %s441
        %s443 = sand.u32 %s172, 1
        %s444 = smul.addr %s443, 768
        %s445 = scalar_lea.vmem [#allocation10], %s444
        %p446 = pneg %p185
        %p447 = pneg %p182
        %p448 = pneg %p211
        %p449 = pneg %p208
        %s450 = sand.u32 %s198, 1
        %s451 = scalar_lea.sflag [#allocation4], %s450
        %s452 = sand.u32 %s198, 1
        %s453 = smul.addr %s452, 256
        %s454 = scalar_lea.vmem [#allocation11], %s453
        %s455 = smul.u32 16, %s28
        %s456 = smul.u32 16, %s28
        %s457 = smul.u32 16, %s28
        %s458 = smul.u32 16, %s28
        %v460 = vld [vmem:[#allocation5] sm:$0xff]
        %v461 = vld [vmem:[#allocation5 + $0x8] sm:$0xff]
        %v462 = vld [vmem:[#allocation5 + $0x10] sm:$0xff]
        %v463 = vld [vmem:[#allocation5 + $0x18] sm:$0xff]
        %v464 = vld [vmem:[#allocation5 + $0x20] sm:$0xff]
        %v465 = vld [vmem:[#allocation5 + $0x28] sm:$0xff]
        %v466 = vld [vmem:[#allocation5 + $0x30] sm:$0xff]
        %v467 = vld [vmem:[#allocation5 + $0x38] sm:$0xff]
        %v468 = vld [vmem:[#allocation5 + $0x40] sm:$0xff]
        %v469 = vld [vmem:[#allocation5 + $0x48] sm:$0xff]
        %v470 = vld [vmem:[#allocation5 + $0x50] sm:$0xff]
        %v471 = vld [vmem:[#allocation5 + $0x58] sm:$0xff]
        %v472 = vld [vmem:[#allocation5 + $0x60] sm:$0xff]
        %v473 = vld [vmem:[#allocation5 + $0x68] sm:$0xff]
        %v474 = vld [vmem:[#allocation5 + $0x70] sm:$0xff]
        %v475 = vld [vmem:[#allocation5 + $0x78] sm:$0xff]
        %v476 = vld [vmem:[#allocation7] sm:$0xf]
        %v477 = vld [vmem:[#allocation7 + $0x4] sm:$0xf]
        %v478 = vld [vmem:[#allocation7 + $0x8] sm:$0xf]
        %v479 = vld [vmem:[#allocation7 + $0xc] sm:$0xf]
        %v480 = vld [vmem:[#allocation7 + $0x10] sm:$0xf]
        %v481 = vld [vmem:[#allocation7 + $0x14] sm:$0xf]
        %v482 = vld [vmem:[#allocation7 + $0x18] sm:$0xf]
        %v483 = vld [vmem:[#allocation7 + $0x1c] sm:$0xf]
        %v484 = vld [vmem:[#allocation7 + $0x20] sm:$0xf]
        %v485 = vld [vmem:[#allocation7 + $0x24] sm:$0xf]
        %v486 = vld [vmem:[#allocation7 + $0x28] sm:$0xf]
        %v487 = vld [vmem:[#allocation7 + $0x2c] sm:$0xf]
        %v488 = vld [vmem:[#allocation7 + $0x30] sm:$0xf]
        %v489 = vld [vmem:[#allocation7 + $0x34] sm:$0xf]
        %v490 = vld [vmem:[#allocation7 + $0x38] sm:$0xf]
        %v491 = vld [vmem:[#allocation7 + $0x3c] sm:$0xf]
        %v492 = vld [vmem:[#allocation7 + $0x40] sm:$0xf]
        %v493 = vld [vmem:[#allocation7 + $0x44] sm:$0xf]
        %v494 = vld [vmem:[#allocation7 + $0x48] sm:$0xf]
        %v495 = vld [vmem:[#allocation7 + $0x4c] sm:$0xf]
        %v496 = vld [vmem:[#allocation7 + $0x50] sm:$0xf]
        %v497 = vld [vmem:[#allocation7 + $0x54] sm:$0xf]
        %v498 = vld [vmem:[#allocation7 + $0x58] sm:$0xf]
        %v499 = vld [vmem:[#allocation7 + $0x5c] sm:$0xf]
        %v500 = vld [vmem:[#allocation7 + $0x60] sm:$0xf]
        %v501 = vld [vmem:[#allocation7 + $0x64] sm:$0xf]
        %v502 = vld [vmem:[#allocation7 + $0x68] sm:$0xf]
        %v503 = vld [vmem:[#allocation7 + $0x6c] sm:$0xf]
        %v504 = vld [vmem:[#allocation7 + $0x70] sm:$0xf]
        %v505 = vld [vmem:[#allocation7 + $0x74] sm:$0xf]
        %v506 = vld [vmem:[#allocation7 + $0x78] sm:$0xf]
        %v507 = vld [vmem:[#allocation7 + $0x7c] sm:$0xf]
        %v508 = vld [vmem:[%s3] sm:$0x1]
        %v510 = vlaneseq
        %v511 = vshrl.u32 %v510, 7
        %v512 = vsub.s32 0, %v511
        %v513 = vrot.slane %v508, %v512
        %v515 = vld [vmem:[%s4] sm:$0x3]
        %v517 = vlaneseq
        %v518 = vshrl.u32 %v517, 7
        %v519 = vsub.s32 0, %v518
        %v520 = vrot.slane %v515, %v519
        %v521 = vlaneseq
        %v522 = vshrl.u32 %v521, 7
        %v523 = vsub.s32 1, %v522
        %v524 = vrot.slane %v515, %v523
        %v527 = vld [vmem:[%s388] sm:$0xff]
        %v528 = vld [vmem:[%s388 + $0x8] sm:$0xff]
        %v529 = vld [vmem:[%s388 + $0x10] sm:$0xff]
        %v530 = vld [vmem:[%s388 + $0x18] sm:$0xff]
        %v531 = vld [vmem:[%s388 + $0x20] sm:$0xff]
        %v532 = vld [vmem:[%s388 + $0x28] sm:$0xff]
        %v533 = vld [vmem:[%s388 + $0x30] sm:$0xff]
        %v534 = vld [vmem:[%s388 + $0x38] sm:$0xff]
        %v535 = vld [vmem:[%s388 + $0x40] sm:$0xff]
        %v536 = vld [vmem:[%s388 + $0x48] sm:$0xff]
        %v537 = vld [vmem:[%s388 + $0x50] sm:$0xff]
        %v538 = vld [vmem:[%s388 + $0x58] sm:$0xff]
        %v539 = vld [vmem:[%s388 + $0x60] sm:$0xff]
        %v540 = vld [vmem:[%s388 + $0x68] sm:$0xff]
        %v541 = vld [vmem:[%s388 + $0x70] sm:$0xff]
        %v542 = vld [vmem:[%s388 + $0x78] sm:$0xff]
        %v543 = vld [vmem:[%s388 + $0x80] sm:$0xff]
        %v544 = vld [vmem:[%s388 + $0x88] sm:$0xff]
        %v545 = vld [vmem:[%s388 + $0x90] sm:$0xff]
        %v546 = vld [vmem:[%s388 + $0x98] sm:$0xff]
        %v547 = vld [vmem:[%s388 + $0xa0] sm:$0xff]
        %v548 = vld [vmem:[%s388 + $0xa8] sm:$0xff]
        %v549 = vld [vmem:[%s388 + $0xb0] sm:$0xff]
        %v550 = vld [vmem:[%s388 + $0xb8] sm:$0xff]
        %v551 = vld [vmem:[%s388 + $0xc0] sm:$0xff]
        %v552 = vld [vmem:[%s388 + $0xc8] sm:$0xff]
        %v553 = vld [vmem:[%s388 + $0xd0] sm:$0xff]
        %v554 = vld [vmem:[%s388 + $0xd8] sm:$0xff]
        %v555 = vld [vmem:[%s388 + $0xe0] sm:$0xff]
        %v556 = vld [vmem:[%s388 + $0xe8] sm:$0xff]
        %v557 = vld [vmem:[%s388 + $0xf0] sm:$0xff]
        %v558 = vld [vmem:[%s388 + $0xf8] sm:$0xff]
        %v559 = vld [vmem:[%s405] sm:$0xff]
        %v560 = vld [vmem:[%s405 + $0x8] sm:$0xff]
        %v561 = vld [vmem:[%s405 + $0x10] sm:$0xff]
        %v562 = vld [vmem:[%s405 + $0x18] sm:$0xff]
        %v563 = vld [vmem:[%s405 + $0x20] sm:$0xff]
        %v564 = vld [vmem:[%s405 + $0x28] sm:$0xff]
        %v565 = vld [vmem:[%s405 + $0x30] sm:$0xff]
        %v566 = vld [vmem:[%s405 + $0x38] sm:$0xff]
        %v567 = vld [vmem:[%s405 + $0x40] sm:$0xff]
        %v568 = vld [vmem:[%s405 + $0x48] sm:$0xff]
        %v569 = vld [vmem:[%s405 + $0x50] sm:$0xff]
        %v570 = vld [vmem:[%s405 + $0x58] sm:$0xff]
        %v571 = vld [vmem:[%s405 + $0x60] sm:$0xff]
        %v572 = vld [vmem:[%s405 + $0x68] sm:$0xff]
        %v573 = vld [vmem:[%s405 + $0x70] sm:$0xff]
        %v574 = vld [vmem:[%s405 + $0x78] sm:$0xff]
        %v575 = vpack.c.bf16 %v529, %v527
        %v576 = vpack.c.bf16 %v530, %v528
        %v577 = vpack.c.bf16 %v533, %v531
        %v578 = vpack.c.bf16 %v534, %v532
        %v579 = vpack.c.bf16 %v537, %v535
        %v580 = vpack.c.bf16 %v538, %v536
        %v581 = vpack.c.bf16 %v541, %v539
        %v582 = vpack.c.bf16 %v542, %v540
        %v583 = vpack.c.bf16 %v545, %v543
        %v584 = vpack.c.bf16 %v546, %v544
        %v585 = vpack.c.bf16 %v549, %v547
        %v586 = vpack.c.bf16 %v550, %v548
        %v587 = vpack.c.bf16 %v553, %v551
        %v588 = vpack.c.bf16 %v554, %v552
        %v589 = vpack.c.bf16 %v557, %v555
        %v590 = vpack.c.bf16 %v558, %v556
        %v623 = vunpack.c.l.b16 %v476
        %v624 = vunpack.c.l.b16 %v477
        %v625 = vunpack.c.l.b16 %v478
        %v626 = vunpack.c.l.b16 %v479
        %v627 = vunpack.c.l.b16 %v480
        %v628 = vunpack.c.l.b16 %v481
        %v629 = vunpack.c.l.b16 %v482
        %v630 = vunpack.c.l.b16 %v483
        %v631 = vunpack.c.l.b16 %v484
        %v632 = vunpack.c.l.b16 %v485
        %v633 = vunpack.c.l.b16 %v486
        %v634 = vunpack.c.l.b16 %v487
        %v635 = vunpack.c.l.b16 %v488
        %v636 = vunpack.c.l.b16 %v489
        %v637 = vunpack.c.l.b16 %v490
        %v638 = vunpack.c.l.b16 %v491
        %v639 = vunpack.c.l.b16 %v492
        %v640 = vunpack.c.l.b16 %v493
        %v641 = vunpack.c.l.b16 %v494
        %v642 = vunpack.c.l.b16 %v495
        %v643 = vunpack.c.l.b16 %v496
        %v644 = vunpack.c.l.b16 %v497
        %v645 = vunpack.c.l.b16 %v498
        %v646 = vunpack.c.l.b16 %v499
        %v647 = vunpack.c.l.b16 %v500
        %v648 = vunpack.c.l.b16 %v501
        %v649 = vunpack.c.l.b16 %v502
        %v650 = vunpack.c.l.b16 %v503
        %v651 = vunpack.c.l.b16 %v504
        %v652 = vunpack.c.l.b16 %v505
        %v653 = vunpack.c.l.b16 %v506
        %v654 = vunpack.c.l.b16 %v507
        %v655 = vpack.c.b16 %v624, %v623
        %v656 = vpack.c.b16 %v626, %v625
        %v657 = vpack.c.b16 %v628, %v627
        %v658 = vpack.c.b16 %v630, %v629
        %v659 = vpack.c.b16 %v632, %v631
        %v660 = vpack.c.b16 %v634, %v633
        %v661 = vpack.c.b16 %v636, %v635
        %v662 = vpack.c.b16 %v638, %v637
        %v663 = vpack.c.b16 %v640, %v639
        %v664 = vpack.c.b16 %v642, %v641
        %v665 = vpack.c.b16 %v644, %v643
        %v666 = vpack.c.b16 %v646, %v645
        %v667 = vpack.c.b16 %v648, %v647
        %v668 = vpack.c.b16 %v650, %v649
        %v669 = vpack.c.b16 %v652, %v651
        %v670 = vpack.c.b16 %v654, %v653
        %687 = vmatprep.subr.bf16.mxu0 0
        %688 = vmatpush1.bf16.msra.mxu0 %v662
        %689 = vmatprep.subr.bf16.mxu0 0
        %690 = vmatpush1.bf16.msra.mxu0 %v661
        %691 = vmatprep.subr.bf16.mxu0 0
        %692 = vmatpush1.bf16.msra.mxu0 %v660
        %693 = vmatprep.subr.bf16.mxu0 0
        %694 = vmatpush1.bf16.msra.mxu0 %v659
        %695 = vmatprep.subr.bf16.mxu0 0
        %696 = vmatpush1.bf16.msra.mxu0 %v658
        %697 = vmatprep.subr.bf16.mxu0 0
        %698 = vmatpush1.bf16.msra.mxu0 %v657
        %699 = vmatprep.subr.bf16.mxu0 0
        %700 = vmatpush1.bf16.msra.mxu0 %v656
        %701 = vmatprep.subr.bf16.mxu0 0
        %702 = vmatpush1.bf16.msra.mxu0 %v655
        %703 = vmatprep.subr.bf16.mxu0 0
        %704 = vmatpush2.bf16.msra.mxu0 %v670
        %705 = vmatprep.subr.bf16.mxu0 0
        %706 = vmatpush2.bf16.msra.mxu0 %v669
        %707 = vmatprep.subr.bf16.mxu0 0
        %708 = vmatpush2.bf16.msra.mxu0 %v668
        %709 = vmatprep.subr.bf16.mxu0 0
        %710 = vmatpush2.bf16.msra.mxu0 %v667
        %711 = vmatprep.subr.bf16.mxu0 0
        %712 = vmatpush2.bf16.msra.mxu0 %v666
        %713 = vmatprep.subr.bf16.mxu0 0
        %714 = vmatpush2.bf16.msra.mxu0 %v665
        %715 = vmatprep.subr.bf16.mxu0 0
        %716 = vmatpush2.bf16.msra.mxu0 %v664
        %717 = vmatprep.subr.bf16.mxu0 0
        %718 = vmatpush2.bf16.msra.mxu0 %v663
        %719 = vmatprep.mubr.bf16.mxu0 %v576
        %720 = vmatmul.mubr.bf16.gmra.mxu0 %v575
        %v721 = vpop.f32.mrf.mxu0
        %v722 = vadd.f32 %v513, %v721
        %v723 = vpop.f32.mrf.mxu0
        %v724 = vpop.f32.mrf.mxu0
        %v725 = vadd.f32 %v513, %v724
        %v726 = vpop.f32.mrf.mxu0
        %727 = vmatprep.mubr.bf16.mxu0 %v578
        %728 = vmatmul.mubr.bf16.gmra.mxu0 %v577
        %v729 = vpop.f32.mrf.mxu0
        %v730 = vadd.f32 %v513, %v729
        %v731 = vpop.f32.mrf.mxu0
        %v732 = vpop.f32.mrf.mxu0
        %v733 = vadd.f32 %v513, %v732
        %v734 = vpop.f32.mrf.mxu0
        %735 = vmatprep.mubr.bf16.mxu0 %v580
        %736 = vmatmul.mubr.bf16.gmra.mxu0 %v579
        %v737 = vpop.f32.mrf.mxu0
        %v738 = vadd.f32 %v513, %v737
        %v739 = vpop.f32.mrf.mxu0
        %v740 = vpop.f32.mrf.mxu0
        %v741 = vadd.f32 %v513, %v740
        %v742 = vpop.f32.mrf.mxu0
        %743 = vmatprep.mubr.bf16.mxu0 %v582
        %744 = vmatmul.mubr.bf16.gmra.mxu0 %v581
        %v745 = vpop.f32.mrf.mxu0
        %v746 = vadd.f32 %v513, %v745
        %v747 = vpop.f32.mrf.mxu0
        %v748 = vpop.f32.mrf.mxu0
        %v749 = vadd.f32 %v513, %v748
        %v750 = vpop.f32.mrf.mxu0
        %751 = vmatprep.mubr.bf16.mxu0 %v584
        %752 = vmatmul.mubr.bf16.gmra.mxu0 %v583
        %v753 = vpop.f32.mrf.mxu0
        %v754 = vadd.f32 %v513, %v753
        %v755 = vpop.f32.mrf.mxu0
        %v756 = vpop.f32.mrf.mxu0
        %v757 = vadd.f32 %v513, %v756
        %v758 = vpop.f32.mrf.mxu0
        %759 = vmatprep.mubr.bf16.mxu0 %v586
        %760 = vmatmul.mubr.bf16.gmra.mxu0 %v585
        %v761 = vpop.f32.mrf.mxu0
        %v762 = vadd.f32 %v513, %v761
        %v763 = vpop.f32.mrf.mxu0
        %v764 = vpop.f32.mrf.mxu0
        %v765 = vadd.f32 %v513, %v764
        %v766 = vpop.f32.mrf.mxu0
        %767 = vmatprep.mubr.bf16.mxu0 %v588
        %768 = vmatmul.mubr.bf16.gmra.mxu0 %v587
        %v769 = vpop.f32.mrf.mxu0
        %v770 = vadd.f32 %v513, %v769
        %v771 = vpop.f32.mrf.mxu0
        %v772 = vpop.f32.mrf.mxu0
        %v773 = vadd.f32 %v513, %v772
        %v774 = vpop.f32.mrf.mxu0
        %775 = vmatprep.mubr.bf16.mxu0 %v590
        %776 = vmatmul.mubr.bf16.gmra.mxu0 %v589
        %v777 = vpop.f32.mrf.mxu0
        %v778 = vadd.f32 %v513, %v777
        %v779 = vpop.f32.mrf.mxu0
        %v780 = vpop.f32.mrf.mxu0
        %v781 = vadd.f32 %v513, %v780
        %v782 = vpop.f32.mrf.mxu0
        %783 = vdwg.mxu0
        %v784 = vxor.u32 %v722, 2147483648
        %v785 = vxor.u32 %v725, 2147483648
        %v786 = vxor.u32 %v730, 2147483648
        %v787 = vxor.u32 %v733, 2147483648
        %v788 = vxor.u32 %v738, 2147483648
        %v789 = vxor.u32 %v741, 2147483648
        %v790 = vxor.u32 %v746, 2147483648
        %v791 = vxor.u32 %v749, 2147483648
        %v792 = vxor.u32 %v754, 2147483648
        %v793 = vxor.u32 %v757, 2147483648
        %v794 = vxor.u32 %v762, 2147483648
        %v795 = vxor.u32 %v765, 2147483648
        %v796 = vxor.u32 %v770, 2147483648
        %v797 = vxor.u32 %v773, 2147483648
        %v798 = vxor.u32 %v778, 2147483648
        %v799 = vxor.u32 %v781, 2147483648
        %v800 = vmul.f32 %v784, 1.442695
        %v801 = vpow.pop %v800
        %v802 = vmul.f32 %v785, 1.442695
        %v803 = vpow.pop %v802
        %v804 = vmul.f32 %v786, 1.442695
        %v805 = vpow.pop %v804
        %v806 = vmul.f32 %v787, 1.442695
        %v807 = vpow.pop %v806
        %v808 = vmul.f32 %v788, 1.442695
        %v809 = vpow.pop %v808
        %v810 = vmul.f32 %v789, 1.442695
        %v811 = vpow.pop %v810
        %v812 = vmul.f32 %v790, 1.442695
        %v813 = vpow.pop %v812
        %v814 = vmul.f32 %v791, 1.442695
        %v815 = vpow.pop %v814
        %v816 = vmul.f32 %v792, 1.442695
        %v817 = vpow.pop %v816
        %v818 = vmul.f32 %v793, 1.442695
        %v819 = vpow.pop %v818
        %v820 = vmul.f32 %v794, 1.442695
        %v821 = vpow.pop %v820
        %v822 = vmul.f32 %v795, 1.442695
        %v823 = vpow.pop %v822
        %v824 = vmul.f32 %v796, 1.442695
        %v825 = vpow.pop %v824
        %v826 = vmul.f32 %v797, 1.442695
        %v827 = vpow.pop %v826
        %v828 = vmul.f32 %v798, 1.442695
        %v829 = vpow.pop %v828
        %v830 = vmul.f32 %v799, 1.442695
        %v831 = vpow.pop %v830
        %v832 = vadd.f32 %v801, 1.0
        %v833 = vadd.f32 %v803, 1.0
        %v834 = vadd.f32 %v805, 1.0
        %v835 = vadd.f32 %v807, 1.0
        %v836 = vadd.f32 %v809, 1.0
        %v837 = vadd.f32 %v811, 1.0
        %v838 = vadd.f32 %v813, 1.0
        %v839 = vadd.f32 %v815, 1.0
        %v840 = vadd.f32 %v817, 1.0
        %v841 = vadd.f32 %v819, 1.0
        %v842 = vadd.f32 %v821, 1.0
        %v843 = vadd.f32 %v823, 1.0
        %v844 = vadd.f32 %v825, 1.0
        %v845 = vadd.f32 %v827, 1.0
        %v846 = vadd.f32 %v829, 1.0
        %v847 = vadd.f32 %v831, 1.0
        %v848 = vrcp.pop %v832
        %v849 = vmul.f32 1.0, %v848
        %v850 = vrcp.pop %v833
        %v851 = vmul.f32 1.0, %v850
        %v852 = vrcp.pop %v834
        %v853 = vmul.f32 1.0, %v852
        %v854 = vrcp.pop %v835
        %v855 = vmul.f32 1.0, %v854
        %v856 = vrcp.pop %v836
        %v857 = vmul.f32 1.0, %v856
        %v858 = vrcp.pop %v837
        %v859 = vmul.f32 1.0, %v858
        %v860 = vrcp.pop %v838
        %v861 = vmul.f32 1.0, %v860
        %v862 = vrcp.pop %v839
        %v863 = vmul.f32 1.0, %v862
        %v864 = vrcp.pop %v840
        %v865 = vmul.f32 1.0, %v864
        %v866 = vrcp.pop %v841
        %v867 = vmul.f32 1.0, %v866
        %v868 = vrcp.pop %v842
        %v869 = vmul.f32 1.0, %v868
        %v870 = vrcp.pop %v843
        %v871 = vmul.f32 1.0, %v870
        %v872 = vrcp.pop %v844
        %v873 = vmul.f32 1.0, %v872
        %v874 = vrcp.pop %v845
        %v875 = vmul.f32 1.0, %v874
        %v876 = vrcp.pop %v846
        %v877 = vmul.f32 1.0, %v876
        %v878 = vrcp.pop %v847
        %v879 = vmul.f32 1.0, %v878
        %vm880 = vcmp.gt.f32.partialorder %v849, %v559
        %vm881 = vcmp.gt.f32.partialorder %v851, %v560
        %vm882 = vcmp.gt.f32.partialorder %v853, %v561
        %vm883 = vcmp.gt.f32.partialorder %v855, %v562
        %vm884 = vcmp.gt.f32.partialorder %v857, %v563
        %vm885 = vcmp.gt.f32.partialorder %v859, %v564
        %vm886 = vcmp.gt.f32.partialorder %v861, %v565
        %vm887 = vcmp.gt.f32.partialorder %v863, %v566
        %vm888 = vcmp.gt.f32.partialorder %v865, %v567
        %vm889 = vcmp.gt.f32.partialorder %v867, %v568
        %vm890 = vcmp.gt.f32.partialorder %v869, %v569
        %vm891 = vcmp.gt.f32.partialorder %v871, %v570
        %vm892 = vcmp.gt.f32.partialorder %v873, %v571
        %vm893 = vcmp.gt.f32.partialorder %v875, %v572
        %vm894 = vcmp.gt.f32.partialorder %v877, %v573
        %vm895 = vcmp.gt.f32.partialorder %v879, %v574
        %v896 = vsel %vm880, 1.0, 0.0
        %v897 = vsel %vm881, 1.0, 0.0
        %v898 = vsel %vm882, 1.0, 0.0
        %v899 = vsel %vm883, 1.0, 0.0
        %v900 = vsel %vm884, 1.0, 0.0
        %v901 = vsel %vm885, 1.0, 0.0
        %v902 = vsel %vm886, 1.0, 0.0
        %v903 = vsel %vm887, 1.0, 0.0
        %v904 = vsel %vm888, 1.0, 0.0
        %v905 = vsel %vm889, 1.0, 0.0
        %v906 = vsel %vm890, 1.0, 0.0
        %v907 = vsel %vm891, 1.0, 0.0
        %v908 = vsel %vm892, 1.0, 0.0
        %v909 = vsel %vm893, 1.0, 0.0
        %v910 = vsel %vm894, 1.0, 0.0
        %v911 = vsel %vm895, 1.0, 0.0
        %v912 = vld [vmem:[%s414] sm:$0xff]
        %v913 = vld [vmem:[%s414 + $0x8] sm:$0xff]
        %v914 = vld [vmem:[%s414 + $0x10] sm:$0xff]
        %v915 = vld [vmem:[%s414 + $0x18] sm:$0xff]
        %v916 = vld [vmem:[%s414 + $0x20] sm:$0xff]
        %v917 = vld [vmem:[%s414 + $0x28] sm:$0xff]
        %v918 = vld [vmem:[%s414 + $0x30] sm:$0xff]
        %v919 = vld [vmem:[%s414 + $0x38] sm:$0xff]
        %v920 = vld [vmem:[%s414 + $0x40] sm:$0xff]
        %v921 = vld [vmem:[%s414 + $0x48] sm:$0xff]
        %v922 = vld [vmem:[%s414 + $0x50] sm:$0xff]
        %v923 = vld [vmem:[%s414 + $0x58] sm:$0xff]
        %v924 = vld [vmem:[%s414 + $0x60] sm:$0xff]
        %v925 = vld [vmem:[%s414 + $0x68] sm:$0xff]
        %v926 = vld [vmem:[%s414 + $0x70] sm:$0xff]
        %v927 = vld [vmem:[%s414 + $0x78] sm:$0xff]
        %v928 = vld [vmem:[%s414 + $0x80] sm:$0xff]
        %v929 = vld [vmem:[%s414 + $0x88] sm:$0xff]
        %v930 = vld [vmem:[%s414 + $0x90] sm:$0xff]
        %v931 = vld [vmem:[%s414 + $0x98] sm:$0xff]
        %v932 = vld [vmem:[%s414 + $0xa0] sm:$0xff]
        %v933 = vld [vmem:[%s414 + $0xa8] sm:$0xff]
        %v934 = vld [vmem:[%s414 + $0xb0] sm:$0xff]
        %v935 = vld [vmem:[%s414 + $0xb8] sm:$0xff]
        %v936 = vld [vmem:[%s414 + $0xc0] sm:$0xff]
        %v937 = vld [vmem:[%s414 + $0xc8] sm:$0xff]
        %v938 = vld [vmem:[%s414 + $0xd0] sm:$0xff]
        %v939 = vld [vmem:[%s414 + $0xd8] sm:$0xff]
        %v940 = vld [vmem:[%s414 + $0xe0] sm:$0xff]
        %v941 = vld [vmem:[%s414 + $0xe8] sm:$0xff]
        %v942 = vld [vmem:[%s414 + $0xf0] sm:$0xff]
        %v943 = vld [vmem:[%s414 + $0xf8] sm:$0xff]
        %v944 = vpack.c.bf16 %v897, %v896
        %v945 = vpack.c.bf16 %v899, %v898
        %v946 = vpack.c.bf16 %v901, %v900
        %v947 = vpack.c.bf16 %v903, %v902
        %v948 = vpack.c.bf16 %v905, %v904
        %v949 = vpack.c.bf16 %v907, %v906
        %v950 = vpack.c.bf16 %v909, %v908
        %v951 = vpack.c.bf16 %v911, %v910
        %v968 = vunpack.c.l.b16 %v460
        %v969 = vunpack.c.h.b16 %v460
        %v970 = vunpack.c.l.b16 %v461
        %v971 = vunpack.c.h.b16 %v461
        %v972 = vunpack.c.l.b16 %v462
        %v973 = vunpack.c.h.b16 %v462
        %v974 = vunpack.c.l.b16 %v463
        %v975 = vunpack.c.h.b16 %v463
        %v976 = vunpack.c.l.b16 %v464
        %v977 = vunpack.c.h.b16 %v464
        %v978 = vunpack.c.l.b16 %v465
        %v979 = vunpack.c.h.b16 %v465
        %v980 = vunpack.c.l.b16 %v466
        %v981 = vunpack.c.h.b16 %v466
        %v982 = vunpack.c.l.b16 %v467
        %v983 = vunpack.c.h.b16 %v467
        %v984 = vunpack.c.l.b16 %v468
        %v985 = vunpack.c.h.b16 %v468
        %v986 = vunpack.c.l.b16 %v469
        %v987 = vunpack.c.h.b16 %v469
        %v988 = vunpack.c.l.b16 %v470
        %v989 = vunpack.c.h.b16 %v470
        %v990 = vunpack.c.l.b16 %v471
        %v991 = vunpack.c.h.b16 %v471
        %v992 = vunpack.c.l.b16 %v472
        %v993 = vunpack.c.h.b16 %v472
        %v994 = vunpack.c.l.b16 %v473
        %v995 = vunpack.c.h.b16 %v473
        %v996 = vunpack.c.l.b16 %v474
        %v997 = vunpack.c.h.b16 %v474
        %v998 = vunpack.c.l.b16 %v475
        %v999 = vunpack.c.h.b16 %v475
        %v1000 = vpack.c.b16 %v970, %v968
        %v1001 = vpack.c.b16 %v971, %v969
        %v1002 = vpack.c.b16 %v974, %v972
        %v1003 = vpack.c.b16 %v975, %v973
        %v1004 = vpack.c.b16 %v978, %v976
        %v1005 = vpack.c.b16 %v979, %v977
        %v1006 = vpack.c.b16 %v982, %v980
        %v1007 = vpack.c.b16 %v983, %v981
        %v1008 = vpack.c.b16 %v986, %v984
        %v1009 = vpack.c.b16 %v987, %v985
        %v1010 = vpack.c.b16 %v990, %v988
        %v1011 = vpack.c.b16 %v991, %v989
        %v1012 = vpack.c.b16 %v994, %v992
        %v1013 = vpack.c.b16 %v995, %v993
        %v1014 = vpack.c.b16 %v998, %v996
        %v1015 = vpack.c.b16 %v999, %v997
        %1032 = vmatprep.subr.bf16.mxu0 %v1015
        %1033 = vmatpush1.bf16.msra.mxu0 %v1014
        %1034 = vmatprep.subr.bf16.mxu0 %v1013
        %1035 = vmatpush1.bf16.msra.mxu0 %v1012
        %1036 = vmatprep.subr.bf16.mxu0 %v1011
        %1037 = vmatpush1.bf16.msra.mxu0 %v1010
        %1038 = vmatprep.subr.bf16.mxu0 %v1009
        %1039 = vmatpush1.bf16.msra.mxu0 %v1008
        %1040 = vmatprep.subr.bf16.mxu0 %v1007
        %1041 = vmatpush1.bf16.msra.mxu0 %v1006
        %1042 = vmatprep.subr.bf16.mxu0 %v1005
        %1043 = vmatpush1.bf16.msra.mxu0 %v1004
        %1044 = vmatprep.subr.bf16.mxu0 %v1003
        %1045 = vmatpush1.bf16.msra.mxu0 %v1002
        %1046 = vmatprep.subr.bf16.mxu0 %v1001
        %1047 = vmatpush1.bf16.msra.mxu0 %v1000
        %1048 = vmatprep.subr.bf16.mxu0 0
        %1049 = vmatpush2.bf16.msra.mxu0 0
        %1050 = vmatprep.subr.bf16.mxu0 0
        %1051 = vmatpush2.bf16.msra.mxu0 0
        %1052 = vmatprep.subr.bf16.mxu0 0
        %1053 = vmatpush2.bf16.msra.mxu0 0
        %1054 = vmatprep.subr.bf16.mxu0 0
        %1055 = vmatpush2.bf16.msra.mxu0 0
        %1056 = vmatprep.subr.bf16.mxu0 0
        %1057 = vmatpush2.bf16.msra.mxu0 0
        %1058 = vmatprep.subr.bf16.mxu0 0
        %1059 = vmatpush2.bf16.msra.mxu0 0
        %1060 = vmatprep.subr.bf16.mxu0 0
        %1061 = vmatpush2.bf16.msra.mxu0 0
        %1062 = vmatprep.subr.bf16.mxu0 0
        %1063 = vmatpush2.bf16.msra.mxu0 0
        %1064 = vmatprep.mubr.bf16.mxu0 0
        %1065 = vmatmul.mubr.bf16.gmra.mxu0 %v944
        %v1066 = vpop.f32.mrf.mxu0
        %v1067 = vadd.f32 %v520, %v1066
        %v1068 = vpop.f32.mrf.mxu0
        %v1069 = vadd.f32 %v524, %v1068
        %v1070 = vpop.f32.mrf.mxu0
        %v1071 = vadd.f32 %v520, %v1070
        %v1072 = vpop.f32.mrf.mxu0
        %v1073 = vadd.f32 %v524, %v1072
        %1074 = vmatprep.mubr.bf16.mxu0 0
        %1075 = vmatmul.mubr.bf16.gmra.mxu0 %v945
        %v1076 = vpop.f32.mrf.mxu0
        %v1077 = vadd.f32 %v520, %v1076
        %v1078 = vpop.f32.mrf.mxu0
        %v1079 = vadd.f32 %v524, %v1078
        %v1080 = vpop.f32.mrf.mxu0
        %v1081 = vadd.f32 %v520, %v1080
        %v1082 = vpop.f32.mrf.mxu0
        %v1083 = vadd.f32 %v524, %v1082
        %1084 = vmatprep.mubr.bf16.mxu0 0
        %1085 = vmatmul.mubr.bf16.gmra.mxu0 %v946
        %v1086 = vpop.f32.mrf.mxu0
        %v1087 = vadd.f32 %v520, %v1086
        %v1088 = vpop.f32.mrf.mxu0
        %v1089 = vadd.f32 %v524, %v1088
        %v1090 = vpop.f32.mrf.mxu0
        %v1091 = vadd.f32 %v520, %v1090
        %v1092 = vpop.f32.mrf.mxu0
        %v1093 = vadd.f32 %v524, %v1092
        %1094 = vmatprep.mubr.bf16.mxu0 0
        %1095 = vmatmul.mubr.bf16.gmra.mxu0 %v947
        %v1096 = vpop.f32.mrf.mxu0
        %v1097 = vadd.f32 %v520, %v1096
        %v1098 = vpop.f32.mrf.mxu0
        %v1099 = vadd.f32 %v524, %v1098
        %v1100 = vpop.f32.mrf.mxu0
        %v1101 = vadd.f32 %v520, %v1100
        %v1102 = vpop.f32.mrf.mxu0
        %v1103 = vadd.f32 %v524, %v1102
        %1104 = vmatprep.mubr.bf16.mxu0 0
        %1105 = vmatmul.mubr.bf16.gmra.mxu0 %v948
        %v1106 = vpop.f32.mrf.mxu0
        %v1107 = vadd.f32 %v520, %v1106
        %v1108 = vpop.f32.mrf.mxu0
        %v1109 = vadd.f32 %v524, %v1108
        %v1110 = vpop.f32.mrf.mxu0
        %v1111 = vadd.f32 %v520, %v1110
        %v1112 = vpop.f32.mrf.mxu0
        %v1113 = vadd.f32 %v524, %v1112
        %1114 = vmatprep.mubr.bf16.mxu0 0
        %1115 = vmatmul.mubr.bf16.gmra.mxu0 %v949
        %v1116 = vpop.f32.mrf.mxu0
        %v1117 = vadd.f32 %v520, %v1116
        %v1118 = vpop.f32.mrf.mxu0
        %v1119 = vadd.f32 %v524, %v1118
        %v1120 = vpop.f32.mrf.mxu0
        %v1121 = vadd.f32 %v520, %v1120
        %v1122 = vpop.f32.mrf.mxu0
        %v1123 = vadd.f32 %v524, %v1122
        %1124 = vmatprep.mubr.bf16.mxu0 0
        %1125 = vmatmul.mubr.bf16.gmra.mxu0 %v950
        %v1126 = vpop.f32.mrf.mxu0
        %v1127 = vadd.f32 %v520, %v1126
        %v1128 = vpop.f32.mrf.mxu0
        %v1129 = vadd.f32 %v524, %v1128
        %v1130 = vpop.f32.mrf.mxu0
        %v1131 = vadd.f32 %v520, %v1130
        %v1132 = vpop.f32.mrf.mxu0
        %v1133 = vadd.f32 %v524, %v1132
        %1134 = vmatprep.mubr.bf16.mxu0 0
        %1135 = vmatmul.mubr.bf16.gmra.mxu0 %v951
        %v1136 = vpop.f32.mrf.mxu0
        %v1137 = vadd.f32 %v520, %v1136
        %v1138 = vpop.f32.mrf.mxu0
        %v1139 = vadd.f32 %v524, %v1138
        %v1140 = vpop.f32.mrf.mxu0
        %v1141 = vadd.f32 %v520, %v1140
        %v1142 = vpop.f32.mrf.mxu0
        %v1143 = vadd.f32 %v524, %v1142
        %1144 = vdwg.mxu0
        %v1145 = vxor.u32 %v1067, 2147483648
        %v1146 = vxor.u32 %v1069, 2147483648
        %v1147 = vxor.u32 %v1071, 2147483648
        %v1148 = vxor.u32 %v1073, 2147483648
        %v1149 = vxor.u32 %v1077, 2147483648
        %v1150 = vxor.u32 %v1079, 2147483648
        %v1151 = vxor.u32 %v1081, 2147483648
        %v1152 = vxor.u32 %v1083, 2147483648
        %v1153 = vxor.u32 %v1087, 2147483648
        %v1154 = vxor.u32 %v1089, 2147483648
        %v1155 = vxor.u32 %v1091, 2147483648
        %v1156 = vxor.u32 %v1093, 2147483648
        %v1157 = vxor.u32 %v1097, 2147483648
        %v1158 = vxor.u32 %v1099, 2147483648
        %v1159 = vxor.u32 %v1101, 2147483648
        %v1160 = vxor.u32 %v1103, 2147483648
        %v1161 = vxor.u32 %v1107, 2147483648
        %v1162 = vxor.u32 %v1109, 2147483648
        %v1163 = vxor.u32 %v1111, 2147483648
        %v1164 = vxor.u32 %v1113, 2147483648
        %v1165 = vxor.u32 %v1117, 2147483648
        %v1166 = vxor.u32 %v1119, 2147483648
        %v1167 = vxor.u32 %v1121, 2147483648
        %v1168 = vxor.u32 %v1123, 2147483648
        %v1169 = vxor.u32 %v1127, 2147483648
        %v1170 = vxor.u32 %v1129, 2147483648
        %v1171 = vxor.u32 %v1131, 2147483648
        %v1172 = vxor.u32 %v1133, 2147483648
        %v1173 = vxor.u32 %v1137, 2147483648
        %v1174 = vxor.u32 %v1139, 2147483648
        %v1175 = vxor.u32 %v1141, 2147483648
        %v1176 = vxor.u32 %v1143, 2147483648
        %v1177 = vmul.f32 %v1145, 1.442695
        %v1178 = vpow.pop %v1177
        %v1179 = vmul.f32 %v1146, 1.442695
        %v1180 = vpow.pop %v1179
        %v1181 = vmul.f32 %v1147, 1.442695
        %v1182 = vpow.pop %v1181
        %v1183 = vmul.f32 %v1148, 1.442695
        %v1184 = vpow.pop %v1183
        %v1185 = vmul.f32 %v1149, 1.442695
        %v1186 = vpow.pop %v1185
        %v1187 = vmul.f32 %v1150, 1.442695
        %v1188 = vpow.pop %v1187
        %v1189 = vmul.f32 %v1151, 1.442695
        %v1190 = vpow.pop %v1189
        %v1191 = vmul.f32 %v1152, 1.442695
        %v1192 = vpow.pop %v1191
        %v1193 = vmul.f32 %v1153, 1.442695
        %v1194 = vpow.pop %v1193
        %v1195 = vmul.f32 %v1154, 1.442695
        %v1196 = vpow.pop %v1195
        %v1197 = vmul.f32 %v1155, 1.442695
        %v1198 = vpow.pop %v1197
        %v1199 = vmul.f32 %v1156, 1.442695
        %v1200 = vpow.pop %v1199
        %v1201 = vmul.f32 %v1157, 1.442695
        %v1202 = vpow.pop %v1201
        %v1203 = vmul.f32 %v1158, 1.442695
        %v1204 = vpow.pop %v1203
        %v1205 = vmul.f32 %v1159, 1.442695
        %v1206 = vpow.pop %v1205
        %v1207 = vmul.f32 %v1160, 1.442695
        %v1208 = vpow.pop %v1207
        %v1209 = vmul.f32 %v1161, 1.442695
        %v1210 = vpow.pop %v1209
        %v1211 = vmul.f32 %v1162, 1.442695
        %v1212 = vpow.pop %v1211
        %v1213 = vmul.f32 %v1163, 1.442695
        %v1214 = vpow.pop %v1213
        %v1215 = vmul.f32 %v1164, 1.442695
        %v1216 = vpow.pop %v1215
        %v1217 = vmul.f32 %v1165, 1.442695
        %v1218 = vpow.pop %v1217
        %v1219 = vmul.f32 %v1166, 1.442695
        %v1220 = vpow.pop %v1219
        %v1221 = vmul.f32 %v1167, 1.442695
        %v1222 = vpow.pop %v1221
        %v1223 = vmul.f32 %v1168, 1.442695
        %v1224 = vpow.pop %v1223
        %v1225 = vmul.f32 %v1169, 1.442695
        %v1226 = vpow.pop %v1225
        %v1227 = vmul.f32 %v1170, 1.442695
        %v1228 = vpow.pop %v1227
        %v1229 = vmul.f32 %v1171, 1.442695
        %v1230 = vpow.pop %v1229
        %v1231 = vmul.f32 %v1172, 1.442695
        %v1232 = vpow.pop %v1231
        %v1233 = vmul.f32 %v1173, 1.442695
        %v1234 = vpow.pop %v1233
        %v1235 = vmul.f32 %v1174, 1.442695
        %v1236 = vpow.pop %v1235
        %v1237 = vmul.f32 %v1175, 1.442695
        %v1238 = vpow.pop %v1237
        %v1239 = vmul.f32 %v1176, 1.442695
        %v1240 = vpow.pop %v1239
        %v1241 = vadd.f32 %v1178, 1.0
        %v1242 = vadd.f32 %v1180, 1.0
        %v1243 = vadd.f32 %v1182, 1.0
        %v1244 = vadd.f32 %v1184, 1.0
        %v1245 = vadd.f32 %v1186, 1.0
        %v1246 = vadd.f32 %v1188, 1.0
        %v1247 = vadd.f32 %v1190, 1.0
        %v1248 = vadd.f32 %v1192, 1.0
        %v1249 = vadd.f32 %v1194, 1.0
        %v1250 = vadd.f32 %v1196, 1.0
        %v1251 = vadd.f32 %v1198, 1.0
        %v1252 = vadd.f32 %v1200, 1.0
        %v1253 = vadd.f32 %v1202, 1.0
        %v1254 = vadd.f32 %v1204, 1.0
        %v1255 = vadd.f32 %v1206, 1.0
        %v1256 = vadd.f32 %v1208, 1.0
        %v1257 = vadd.f32 %v1210, 1.0
        %v1258 = vadd.f32 %v1212, 1.0
        %v1259 = vadd.f32 %v1214, 1.0
        %v1260 = vadd.f32 %v1216, 1.0
        %v1261 = vadd.f32 %v1218, 1.0
        %v1262 = vadd.f32 %v1220, 1.0
        %v1263 = vadd.f32 %v1222, 1.0
        %v1264 = vadd.f32 %v1224, 1.0
        %v1265 = vadd.f32 %v1226, 1.0
        %v1266 = vadd.f32 %v1228, 1.0
        %v1267 = vadd.f32 %v1230, 1.0
        %v1268 = vadd.f32 %v1232, 1.0
        %v1269 = vadd.f32 %v1234, 1.0
        %v1270 = vadd.f32 %v1236, 1.0
        %v1271 = vadd.f32 %v1238, 1.0
        %v1272 = vadd.f32 %v1240, 1.0
        %v1273 = vrcp.pop %v1241
        %v1274 = vmul.f32 1.0, %v1273
        %v1275 = vrcp.pop %v1242
        %v1276 = vmul.f32 1.0, %v1275
        %v1277 = vrcp.pop %v1243
        %v1278 = vmul.f32 1.0, %v1277
        %v1279 = vrcp.pop %v1244
        %v1280 = vmul.f32 1.0, %v1279
        %v1281 = vrcp.pop %v1245
        %v1282 = vmul.f32 1.0, %v1281
        %v1283 = vrcp.pop %v1246
        %v1284 = vmul.f32 1.0, %v1283
        %v1285 = vrcp.pop %v1247
        %v1286 = vmul.f32 1.0, %v1285
        %v1287 = vrcp.pop %v1248
        %v1288 = vmul.f32 1.0, %v1287
        %v1289 = vrcp.pop %v1249
        %v1290 = vmul.f32 1.0, %v1289
        %v1291 = vrcp.pop %v1250
        %v1292 = vmul.f32 1.0, %v1291
        %v1293 = vrcp.pop %v1251
        %v1294 = vmul.f32 1.0, %v1293
        %v1295 = vrcp.pop %v1252
        %v1296 = vmul.f32 1.0, %v1295
        %v1297 = vrcp.pop %v1253
        %v1298 = vmul.f32 1.0, %v1297
        %v1299 = vrcp.pop %v1254
        %v1300 = vmul.f32 1.0, %v1299
        %v1301 = vrcp.pop %v1255
        %v1302 = vmul.f32 1.0, %v1301
        %v1303 = vrcp.pop %v1256
        %v1304 = vmul.f32 1.0, %v1303
        %v1305 = vrcp.pop %v1257
        %v1306 = vmul.f32 1.0, %v1305
        %v1307 = vrcp.pop %v1258
        %v1308 = vmul.f32 1.0, %v1307
        %v1309 = vrcp.pop %v1259
        %v1310 = vmul.f32 1.0, %v1309
        %v1311 = vrcp.pop %v1260
        %v1312 = vmul.f32 1.0, %v1311
        %v1313 = vrcp.pop %v1261
        %v1314 = vmul.f32 1.0, %v1313
        %v1315 = vrcp.pop %v1262
        %v1316 = vmul.f32 1.0, %v1315
        %v1317 = vrcp.pop %v1263
        %v1318 = vmul.f32 1.0, %v1317
        %v1319 = vrcp.pop %v1264
        %v1320 = vmul.f32 1.0, %v1319
        %v1321 = vrcp.pop %v1265
        %v1322 = vmul.f32 1.0, %v1321
        %v1323 = vrcp.pop %v1266
        %v1324 = vmul.f32 1.0, %v1323
        %v1325 = vrcp.pop %v1267
        %v1326 = vmul.f32 1.0, %v1325
        %v1327 = vrcp.pop %v1268
        %v1328 = vmul.f32 1.0, %v1327
        %v1329 = vrcp.pop %v1269
        %v1330 = vmul.f32 1.0, %v1329
        %v1331 = vrcp.pop %v1270
        %v1332 = vmul.f32 1.0, %v1331
        %v1333 = vrcp.pop %v1271
        %v1334 = vmul.f32 1.0, %v1333
        %v1335 = vrcp.pop %v1272
        %v1336 = vmul.f32 1.0, %v1335
        %vm1337 = vcmp.gt.f32.partialorder %v1274, %v912
        %vm1338 = vcmp.gt.f32.partialorder %v1276, %v913
        %vm1339 = vcmp.gt.f32.partialorder %v1278, %v914
        %vm1340 = vcmp.gt.f32.partialorder %v1280, %v915
        %vm1341 = vcmp.gt.f32.partialorder %v1282, %v916
        %vm1342 = vcmp.gt.f32.partialorder %v1284, %v917
        %vm1343 = vcmp.gt.f32.partialorder %v1286, %v918
        %vm1344 = vcmp.gt.f32.partialorder %v1288, %v919
        %vm1345 = vcmp.gt.f32.partialorder %v1290, %v920
        %vm1346 = vcmp.gt.f32.partialorder %v1292, %v921
        %vm1347 = vcmp.gt.f32.partialorder %v1294, %v922
        %vm1348 = vcmp.gt.f32.partialorder %v1296, %v923
        %vm1349 = vcmp.gt.f32.partialorder %v1298, %v924
        %vm1350 = vcmp.gt.f32.partialorder %v1300, %v925
        %vm1351 = vcmp.gt.f32.partialorder %v1302, %v926
        %vm1352 = vcmp.gt.f32.partialorder %v1304, %v927
        %vm1353 = vcmp.gt.f32.partialorder %v1306, %v928
        %vm1354 = vcmp.gt.f32.partialorder %v1308, %v929
        %vm1355 = vcmp.gt.f32.partialorder %v1310, %v930
        %vm1356 = vcmp.gt.f32.partialorder %v1312, %v931
        %vm1357 = vcmp.gt.f32.partialorder %v1314, %v932
        %vm1358 = vcmp.gt.f32.partialorder %v1316, %v933
        %vm1359 = vcmp.gt.f32.partialorder %v1318, %v934
        %vm1360 = vcmp.gt.f32.partialorder %v1320, %v935
        %vm1361 = vcmp.gt.f32.partialorder %v1322, %v936
        %vm1362 = vcmp.gt.f32.partialorder %v1324, %v937
        %vm1363 = vcmp.gt.f32.partialorder %v1326, %v938
        %vm1364 = vcmp.gt.f32.partialorder %v1328, %v939
        %vm1365 = vcmp.gt.f32.partialorder %v1330, %v940
        %vm1366 = vcmp.gt.f32.partialorder %v1332, %v941
        %vm1367 = vcmp.gt.f32.partialorder %v1334, %v942
        %vm1368 = vcmp.gt.f32.partialorder %v1336, %v943
        %v1369 = vsel %vm1337, 1.0, 0.0
        %v1370 = vsel %vm1338, 1.0, 0.0
        %v1371 = vsel %vm1339, 1.0, 0.0
        %v1372 = vsel %vm1340, 1.0, 0.0
        %v1373 = vsel %vm1341, 1.0, 0.0
        %v1374 = vsel %vm1342, 1.0, 0.0
        %v1375 = vsel %vm1343, 1.0, 0.0
        %v1376 = vsel %vm1344, 1.0, 0.0
        %v1377 = vsel %vm1345, 1.0, 0.0
        %v1378 = vsel %vm1346, 1.0, 0.0
        %v1379 = vsel %vm1347, 1.0, 0.0
        %v1380 = vsel %vm1348, 1.0, 0.0
        %v1381 = vsel %vm1349, 1.0, 0.0
        %v1382 = vsel %vm1350, 1.0, 0.0
        %v1383 = vsel %vm1351, 1.0, 0.0
        %v1384 = vsel %vm1352, 1.0, 0.0
        %v1385 = vsel %vm1353, 1.0, 0.0
        %v1386 = vsel %vm1354, 1.0, 0.0
        %v1387 = vsel %vm1355, 1.0, 0.0
        %v1388 = vsel %vm1356, 1.0, 0.0
        %v1389 = vsel %vm1357, 1.0, 0.0
        %v1390 = vsel %vm1358, 1.0, 0.0
        %v1391 = vsel %vm1359, 1.0, 0.0
        %v1392 = vsel %vm1360, 1.0, 0.0
        %v1393 = vsel %vm1361, 1.0, 0.0
        %v1394 = vsel %vm1362, 1.0, 0.0
        %v1395 = vsel %vm1363, 1.0, 0.0
        %v1396 = vsel %vm1364, 1.0, 0.0
        %v1397 = vsel %vm1365, 1.0, 0.0
        %v1398 = vsel %vm1366, 1.0, 0.0
        %v1399 = vsel %vm1367, 1.0, 0.0
        %v1400 = vsel %vm1368, 1.0, 0.0
        %s1401 = scalar_lea.vmem %s405, 128 [#allocation8]
        %v1402 = vld [vmem:[%s1401] sm:$0xff]
        %v1403 = vld [vmem:[%s1401 + $0x8] sm:$0xff]
        %v1404 = vld [vmem:[%s1401 + $0x10] sm:$0xff]
        %v1405 = vld [vmem:[%s1401 + $0x18] sm:$0xff]
        %v1406 = vld [vmem:[%s1401 + $0x20] sm:$0xff]
        %v1407 = vld [vmem:[%s1401 + $0x28] sm:$0xff]
        %v1408 = vld [vmem:[%s1401 + $0x30] sm:$0xff]
        %v1409 = vld [vmem:[%s1401 + $0x38] sm:$0xff]
        %v1410 = vld [vmem:[%s1401 + $0x40] sm:$0xff]
        %v1411 = vld [vmem:[%s1401 + $0x48] sm:$0xff]
        %v1412 = vld [vmem:[%s1401 + $0x50] sm:$0xff]
        %v1413 = vld [vmem:[%s1401 + $0x58] sm:$0xff]
        %v1414 = vld [vmem:[%s1401 + $0x60] sm:$0xff]
        %v1415 = vld [vmem:[%s1401 + $0x68] sm:$0xff]
        %v1416 = vld [vmem:[%s1401 + $0x70] sm:$0xff]
        %v1417 = vld [vmem:[%s1401 + $0x78] sm:$0xff]
        %v1418 = vpack.c.bf16 %v1371, %v1369
        %v1419 = vpack.c.bf16 %v1372, %v1370
        %v1420 = vpack.c.bf16 %v1375, %v1373
        %v1421 = vpack.c.bf16 %v1376, %v1374
        %v1422 = vpack.c.bf16 %v1379, %v1377
        %v1423 = vpack.c.bf16 %v1380, %v1378
        %v1424 = vpack.c.bf16 %v1383, %v1381
        %v1425 = vpack.c.bf16 %v1384, %v1382
        %v1426 = vpack.c.bf16 %v1387, %v1385
        %v1427 = vpack.c.bf16 %v1388, %v1386
        %v1428 = vpack.c.bf16 %v1391, %v1389
        %v1429 = vpack.c.bf16 %v1392, %v1390
        %v1430 = vpack.c.bf16 %v1395, %v1393
        %v1431 = vpack.c.bf16 %v1396, %v1394
        %v1432 = vpack.c.bf16 %v1399, %v1397
        %v1433 = vpack.c.bf16 %v1400, %v1398
        %1434 = vmatprep.subr.bf16.mxu0 0
        %1435 = vmatpush1.bf16.msra.mxu0 %v662
        %1436 = vmatprep.subr.bf16.mxu0 0
        %1437 = vmatpush1.bf16.msra.mxu0 %v661
        %1438 = vmatprep.subr.bf16.mxu0 0
        %1439 = vmatpush1.bf16.msra.mxu0 %v660
        %1440 = vmatprep.subr.bf16.mxu0 0
        %1441 = vmatpush1.bf16.msra.mxu0 %v659
        %1442 = vmatprep.subr.bf16.mxu0 0
        %1443 = vmatpush1.bf16.msra.mxu0 %v658
        %1444 = vmatprep.subr.bf16.mxu0 0
        %1445 = vmatpush1.bf16.msra.mxu0 %v657
        %1446 = vmatprep.subr.bf16.mxu0 0
        %1447 = vmatpush1.bf16.msra.mxu0 %v656
        %1448 = vmatprep.subr.bf16.mxu0 0
        %1449 = vmatpush1.bf16.msra.mxu0 %v655
        %1450 = vmatprep.subr.bf16.mxu0 0
        %1451 = vmatpush2.bf16.msra.mxu0 %v670
        %1452 = vmatprep.subr.bf16.mxu0 0
        %1453 = vmatpush2.bf16.msra.mxu0 %v669
        %1454 = vmatprep.subr.bf16.mxu0 0
        %1455 = vmatpush2.bf16.msra.mxu0 %v668
        %1456 = vmatprep.subr.bf16.mxu0 0
        %1457 = vmatpush2.bf16.msra.mxu0 %v667
        %1458 = vmatprep.subr.bf16.mxu0 0
        %1459 = vmatpush2.bf16.msra.mxu0 %v666
        %1460 = vmatprep.subr.bf16.mxu0 0
        %1461 = vmatpush2.bf16.msra.mxu0 %v665
        %1462 = vmatprep.subr.bf16.mxu0 0
        %1463 = vmatpush2.bf16.msra.mxu0 %v664
        %1464 = vmatprep.subr.bf16.mxu0 0
        %1465 = vmatpush2.bf16.msra.mxu0 %v663
        %1466 = vmatprep.mubr.bf16.mxu0 %v1419
        %1467 = vmatmul.mubr.bf16.gmra.mxu0 %v1418
        %v1468 = vpop.f32.mrf.mxu0
        %v1469 = vadd.f32 %v513, %v1468
        %v1470 = vpop.f32.mrf.mxu0
        %v1471 = vpop.f32.mrf.mxu0
        %v1472 = vadd.f32 %v513, %v1471
        %v1473 = vpop.f32.mrf.mxu0
        %1474 = vmatprep.mubr.bf16.mxu0 %v1421
        %1475 = vmatmul.mubr.bf16.gmra.mxu0 %v1420
        %v1476 = vpop.f32.mrf.mxu0
        %v1477 = vadd.f32 %v513, %v1476
        %v1478 = vpop.f32.mrf.mxu0
        %v1479 = vpop.f32.mrf.mxu0
        %v1480 = vadd.f32 %v513, %v1479
        %v1481 = vpop.f32.mrf.mxu0
        %1482 = vmatprep.mubr.bf16.mxu0 %v1423
        %1483 = vmatmul.mubr.bf16.gmra.mxu0 %v1422
        %v1484 = vpop.f32.mrf.mxu0
        %v1485 = vadd.f32 %v513, %v1484
        %v1486 = vpop.f32.mrf.mxu0
        %v1487 = vpop.f32.mrf.mxu0
        %v1488 = vadd.f32 %v513, %v1487
        %v1489 = vpop.f32.mrf.mxu0
        %1490 = vmatprep.mubr.bf16.mxu0 %v1425
        %1491 = vmatmul.mubr.bf16.gmra.mxu0 %v1424
        %v1492 = vpop.f32.mrf.mxu0
        %v1493 = vadd.f32 %v513, %v1492
        %v1494 = vpop.f32.mrf.mxu0
        %v1495 = vpop.f32.mrf.mxu0
        %v1496 = vadd.f32 %v513, %v1495
        %v1497 = vpop.f32.mrf.mxu0
        %1498 = vmatprep.mubr.bf16.mxu0 %v1427
        %1499 = vmatmul.mubr.bf16.gmra.mxu0 %v1426
        %v1500 = vpop.f32.mrf.mxu0
        %v1501 = vadd.f32 %v513, %v1500
        %v1502 = vpop.f32.mrf.mxu0
        %v1503 = vpop.f32.mrf.mxu0
        %v1504 = vadd.f32 %v513, %v1503
        %v1505 = vpop.f32.mrf.mxu0
        %1506 = vmatprep.mubr.bf16.mxu0 %v1429
        %1507 = vmatmul.mubr.bf16.gmra.mxu0 %v1428
        %v1508 = vpop.f32.mrf.mxu0
        %v1509 = vadd.f32 %v513, %v1508
        %v1510 = vpop.f32.mrf.mxu0
        %v1511 = vpop.f32.mrf.mxu0
        %v1512 = vadd.f32 %v513, %v1511
        %v1513 = vpop.f32.mrf.mxu0
        %1514 = vmatprep.mubr.bf16.mxu0 %v1431
        %1515 = vmatmul.mubr.bf16.gmra.mxu0 %v1430
        %v1516 = vpop.f32.mrf.mxu0
        %v1517 = vadd.f32 %v513, %v1516
        %v1518 = vpop.f32.mrf.mxu0
        %v1519 = vpop.f32.mrf.mxu0
        %v1520 = vadd.f32 %v513, %v1519
        %v1521 = vpop.f32.mrf.mxu0
        %1522 = vmatprep.mubr.bf16.mxu0 %v1433
        %1523 = vmatmul.mubr.bf16.gmra.mxu0 %v1432
        %v1524 = vpop.f32.mrf.mxu0
        %v1525 = vadd.f32 %v513, %v1524
        %v1526 = vpop.f32.mrf.mxu0
        %v1527 = vpop.f32.mrf.mxu0
        %v1528 = vadd.f32 %v513, %v1527
        %v1529 = vpop.f32.mrf.mxu0
        %1530 = vdwg.mxu0
        %v1531 = vxor.u32 %v1469, 2147483648
        %v1532 = vxor.u32 %v1472, 2147483648
        %v1533 = vxor.u32 %v1477, 2147483648
        %v1534 = vxor.u32 %v1480, 2147483648
        %v1535 = vxor.u32 %v1485, 2147483648
        %v1536 = vxor.u32 %v1488, 2147483648
        %v1537 = vxor.u32 %v1493, 2147483648
        %v1538 = vxor.u32 %v1496, 2147483648
        %v1539 = vxor.u32 %v1501, 2147483648
        %v1540 = vxor.u32 %v1504, 2147483648
        %v1541 = vxor.u32 %v1509, 2147483648
        %v1542 = vxor.u32 %v1512, 2147483648
        %v1543 = vxor.u32 %v1517, 2147483648
        %v1544 = vxor.u32 %v1520, 2147483648
        %v1545 = vxor.u32 %v1525, 2147483648
        %v1546 = vxor.u32 %v1528, 2147483648
        %v1547 = vmul.f32 %v1531, 1.442695
        %v1548 = vpow.pop %v1547
        %v1549 = vmul.f32 %v1532, 1.442695
        %v1550 = vpow.pop %v1549
        %v1551 = vmul.f32 %v1533, 1.442695
        %v1552 = vpow.pop %v1551
        %v1553 = vmul.f32 %v1534, 1.442695
        %v1554 = vpow.pop %v1553
        %v1555 = vmul.f32 %v1535, 1.442695
        %v1556 = vpow.pop %v1555
        %v1557 = vmul.f32 %v1536, 1.442695
        %v1558 = vpow.pop %v1557
        %v1559 = vmul.f32 %v1537, 1.442695
        %v1560 = vpow.pop %v1559
        %v1561 = vmul.f32 %v1538, 1.442695
        %v1562 = vpow.pop %v1561
        %v1563 = vmul.f32 %v1539, 1.442695
        %v1564 = vpow.pop %v1563
        %v1565 = vmul.f32 %v1540, 1.442695
        %v1566 = vpow.pop %v1565
        %v1567 = vmul.f32 %v1541, 1.442695
        %v1568 = vpow.pop %v1567
        %v1569 = vmul.f32 %v1542, 1.442695
        %v1570 = vpow.pop %v1569
        %v1571 = vmul.f32 %v1543, 1.442695
        %v1572 = vpow.pop %v1571
        %v1573 = vmul.f32 %v1544, 1.442695
        %v1574 = vpow.pop %v1573
        %v1575 = vmul.f32 %v1545, 1.442695
        %v1576 = vpow.pop %v1575
        %v1577 = vmul.f32 %v1546, 1.442695
        %v1578 = vpow.pop %v1577
        %v1579 = vadd.f32 %v1548, 1.0
        %v1580 = vadd.f32 %v1550, 1.0
        %v1581 = vadd.f32 %v1552, 1.0
        %v1582 = vadd.f32 %v1554, 1.0
        %v1583 = vadd.f32 %v1556, 1.0
        %v1584 = vadd.f32 %v1558, 1.0
        %v1585 = vadd.f32 %v1560, 1.0
        %v1586 = vadd.f32 %v1562, 1.0
        %v1587 = vadd.f32 %v1564, 1.0
        %v1588 = vadd.f32 %v1566, 1.0
        %v1589 = vadd.f32 %v1568, 1.0
        %v1590 = vadd.f32 %v1570, 1.0
        %v1591 = vadd.f32 %v1572, 1.0
        %v1592 = vadd.f32 %v1574, 1.0
        %v1593 = vadd.f32 %v1576, 1.0
        %v1594 = vadd.f32 %v1578, 1.0
        %v1595 = vrcp.pop %v1579
        %v1596 = vmul.f32 1.0, %v1595
        %v1597 = vrcp.pop %v1580
        %v1598 = vmul.f32 1.0, %v1597
        %v1599 = vrcp.pop %v1581
        %v1600 = vmul.f32 1.0, %v1599
        %v1601 = vrcp.pop %v1582
        %v1602 = vmul.f32 1.0, %v1601
        %v1603 = vrcp.pop %v1583
        %v1604 = vmul.f32 1.0, %v1603
        %v1605 = vrcp.pop %v1584
        %v1606 = vmul.f32 1.0, %v1605
        %v1607 = vrcp.pop %v1585
        %v1608 = vmul.f32 1.0, %v1607
        %v1609 = vrcp.pop %v1586
        %v1610 = vmul.f32 1.0, %v1609
        %v1611 = vrcp.pop %v1587
        %v1612 = vmul.f32 1.0, %v1611
        %v1613 = vrcp.pop %v1588
        %v1614 = vmul.f32 1.0, %v1613
        %v1615 = vrcp.pop %v1589
        %v1616 = vmul.f32 1.0, %v1615
        %v1617 = vrcp.pop %v1590
        %v1618 = vmul.f32 1.0, %v1617
        %v1619 = vrcp.pop %v1591
        %v1620 = vmul.f32 1.0, %v1619
        %v1621 = vrcp.pop %v1592
        %v1622 = vmul.f32 1.0, %v1621
        %v1623 = vrcp.pop %v1593
        %v1624 = vmul.f32 1.0, %v1623
        %v1625 = vrcp.pop %v1594
        %v1626 = vmul.f32 1.0, %v1625
        %vm1627 = vcmp.gt.f32.partialorder %v1596, %v1402
        %vm1628 = vcmp.gt.f32.partialorder %v1598, %v1403
        %vm1629 = vcmp.gt.f32.partialorder %v1600, %v1404
        %vm1630 = vcmp.gt.f32.partialorder %v1602, %v1405
        %vm1631 = vcmp.gt.f32.partialorder %v1604, %v1406
        %vm1632 = vcmp.gt.f32.partialorder %v1606, %v1407
        %vm1633 = vcmp.gt.f32.partialorder %v1608, %v1408
        %vm1634 = vcmp.gt.f32.partialorder %v1610, %v1409
        %vm1635 = vcmp.gt.f32.partialorder %v1612, %v1410
        %vm1636 = vcmp.gt.f32.partialorder %v1614, %v1411
        %vm1637 = vcmp.gt.f32.partialorder %v1616, %v1412
        %vm1638 = vcmp.gt.f32.partialorder %v1618, %v1413
        %vm1639 = vcmp.gt.f32.partialorder %v1620, %v1414
        %vm1640 = vcmp.gt.f32.partialorder %v1622, %v1415
        %vm1641 = vcmp.gt.f32.partialorder %v1624, %v1416
        %vm1642 = vcmp.gt.f32.partialorder %v1626, %v1417
        %v1643 = vsel %vm1627, 1.0, 0.0
        %v1644 = vsel %vm1628, 1.0, 0.0
        %v1645 = vsel %vm1629, 1.0, 0.0
        %v1646 = vsel %vm1630, 1.0, 0.0
        %v1647 = vsel %vm1631, 1.0, 0.0
        %v1648 = vsel %vm1632, 1.0, 0.0
        %v1649 = vsel %vm1633, 1.0, 0.0
        %v1650 = vsel %vm1634, 1.0, 0.0
        %v1651 = vsel %vm1635, 1.0, 0.0
        %v1652 = vsel %vm1636, 1.0, 0.0
        %v1653 = vsel %vm1637, 1.0, 0.0
        %v1654 = vsel %vm1638, 1.0, 0.0
        %v1655 = vsel %vm1639, 1.0, 0.0
        %v1656 = vsel %vm1640, 1.0, 0.0
        %v1657 = vsel %vm1641, 1.0, 0.0
        %v1658 = vsel %vm1642, 1.0, 0.0
        %s1659 = scalar_lea.vmem %s414, 256 [#allocation10]
        %v1660 = vld [vmem:[%s1659] sm:$0xff]
        %v1661 = vld [vmem:[%s1659 + $0x8] sm:$0xff]
        %v1662 = vld [vmem:[%s1659 + $0x10] sm:$0xff]
        %v1663 = vld [vmem:[%s1659 + $0x18] sm:$0xff]
        %v1664 = vld [vmem:[%s1659 + $0x20] sm:$0xff]
        %v1665 = vld [vmem:[%s1659 + $0x28] sm:$0xff]
        %v1666 = vld [vmem:[%s1659 + $0x30] sm:$0xff]
        %v1667 = vld [vmem:[%s1659 + $0x38] sm:$0xff]
        %v1668 = vld [vmem:[%s1659 + $0x40] sm:$0xff]
        %v1669 = vld [vmem:[%s1659 + $0x48] sm:$0xff]
        %v1670 = vld [vmem:[%s1659 + $0x50] sm:$0xff]
        %v1671 = vld [vmem:[%s1659 + $0x58] sm:$0xff]
        %v1672 = vld [vmem:[%s1659 + $0x60] sm:$0xff]
        %v1673 = vld [vmem:[%s1659 + $0x68] sm:$0xff]
        %v1674 = vld [vmem:[%s1659 + $0x70] sm:$0xff]
        %v1675 = vld [vmem:[%s1659 + $0x78] sm:$0xff]
        %v1676 = vld [vmem:[%s1659 + $0x80] sm:$0xff]
        %v1677 = vld [vmem:[%s1659 + $0x88] sm:$0xff]
        %v1678 = vld [vmem:[%s1659 + $0x90] sm:$0xff]
        %v1679 = vld [vmem:[%s1659 + $0x98] sm:$0xff]
        %v1680 = vld [vmem:[%s1659 + $0xa0] sm:$0xff]
        %v1681 = vld [vmem:[%s1659 + $0xa8] sm:$0xff]
        %v1682 = vld [vmem:[%s1659 + $0xb0] sm:$0xff]
        %v1683 = vld [vmem:[%s1659 + $0xb8] sm:$0xff]
        %v1684 = vld [vmem:[%s1659 + $0xc0] sm:$0xff]
        %v1685 = vld [vmem:[%s1659 + $0xc8] sm:$0xff]
        %v1686 = vld [vmem:[%s1659 + $0xd0] sm:$0xff]
        %v1687 = vld [vmem:[%s1659 + $0xd8] sm:$0xff]
        %v1688 = vld [vmem:[%s1659 + $0xe0] sm:$0xff]
        %v1689 = vld [vmem:[%s1659 + $0xe8] sm:$0xff]
        %v1690 = vld [vmem:[%s1659 + $0xf0] sm:$0xff]
        %v1691 = vld [vmem:[%s1659 + $0xf8] sm:$0xff]
        %v1692 = vpack.c.bf16 %v1644, %v1643
        %v1693 = vpack.c.bf16 %v1646, %v1645
        %v1694 = vpack.c.bf16 %v1648, %v1647
        %v1695 = vpack.c.bf16 %v1650, %v1649
        %v1696 = vpack.c.bf16 %v1652, %v1651
        %v1697 = vpack.c.bf16 %v1654, %v1653
        %v1698 = vpack.c.bf16 %v1656, %v1655
        %v1699 = vpack.c.bf16 %v1658, %v1657
        %1700 = vmatprep.subr.bf16.mxu0 %v1015
        %1701 = vmatpush1.bf16.msra.mxu0 %v1014
        %1702 = vmatprep.subr.bf16.mxu0 %v1013
        %1703 = vmatpush1.bf16.msra.mxu0 %v1012
        %1704 = vmatprep.subr.bf16.mxu0 %v1011
        %1705 = vmatpush1.bf16.msra.mxu0 %v1010
        %1706 = vmatprep.subr.bf16.mxu0 %v1009
        %1707 = vmatpush1.bf16.msra.mxu0 %v1008
        %1708 = vmatprep.subr.bf16.mxu0 %v1007
        %1709 = vmatpush1.bf16.msra.mxu0 %v1006
        %1710 = vmatprep.subr.bf16.mxu0 %v1005
        %1711 = vmatpush1.bf16.msra.mxu0 %v1004
        %1712 = vmatprep.subr.bf16.mxu0 %v1003
        %1713 = vmatpush1.bf16.msra.mxu0 %v1002
        %1714 = vmatprep.subr.bf16.mxu0 %v1001
        %1715 = vmatpush1.bf16.msra.mxu0 %v1000
        %1716 = vmatprep.subr.bf16.mxu0 0
        %1717 = vmatpush2.bf16.msra.mxu0 0
        %1718 = vmatprep.subr.bf16.mxu0 0
        %1719 = vmatpush2.bf16.msra.mxu0 0
        %1720 = vmatprep.subr.bf16.mxu0 0
        %1721 = vmatpush2.bf16.msra.mxu0 0
        %1722 = vmatprep.subr.bf16.mxu0 0
        %1723 = vmatpush2.bf16.msra.mxu0 0
        %1724 = vmatprep.subr.bf16.mxu0 0
        %1725 = vmatpush2.bf16.msra.mxu0 0
        %1726 = vmatprep.subr.bf16.mxu0 0
        %1727 = vmatpush2.bf16.msra.mxu0 0
        %1728 = vmatprep.subr.bf16.mxu0 0
        %1729 = vmatpush2.bf16.msra.mxu0 0
        %1730 = vmatprep.subr.bf16.mxu0 0
        %1731 = vmatpush2.bf16.msra.mxu0 0
        %1732 = vmatprep.mubr.bf16.mxu0 0
        %1733 = vmatmul.mubr.bf16.gmra.mxu0 %v1692
        %v1734 = vpop.f32.mrf.mxu0
        %v1735 = vadd.f32 %v520, %v1734
        %v1736 = vpop.f32.mrf.mxu0
        %v1737 = vadd.f32 %v524, %v1736
        %v1738 = vpop.f32.mrf.mxu0
        %v1739 = vadd.f32 %v520, %v1738
        %v1740 = vpop.f32.mrf.mxu0
        %v1741 = vadd.f32 %v524, %v1740
        %1742 = vmatprep.mubr.bf16.mxu0 0
        %1743 = vmatmul.mubr.bf16.gmra.mxu0 %v1693
        %v1744 = vpop.f32.mrf.mxu0
        %v1745 = vadd.f32 %v520, %v1744
        %v1746 = vpop.f32.mrf.mxu0
        %v1747 = vadd.f32 %v524, %v1746
        %v1748 = vpop.f32.mrf.mxu0
        %v1749 = vadd.f32 %v520, %v1748
        %v1750 = vpop.f32.mrf.mxu0
        %v1751 = vadd.f32 %v524, %v1750
        %1752 = vmatprep.mubr.bf16.mxu0 0
        %1753 = vmatmul.mubr.bf16.gmra.mxu0 %v1694
        %v1754 = vpop.f32.mrf.mxu0
        %v1755 = vadd.f32 %v520, %v1754
        %v1756 = vpop.f32.mrf.mxu0
        %v1757 = vadd.f32 %v524, %v1756
        %v1758 = vpop.f32.mrf.mxu0
        %v1759 = vadd.f32 %v520, %v1758
        %v1760 = vpop.f32.mrf.mxu0
        %v1761 = vadd.f32 %v524, %v1760
        %1762 = vmatprep.mubr.bf16.mxu0 0
        %1763 = vmatmul.mubr.bf16.gmra.mxu0 %v1695
        %v1764 = vpop.f32.mrf.mxu0
        %v1765 = vadd.f32 %v520, %v1764
        %v1766 = vpop.f32.mrf.mxu0
        %v1767 = vadd.f32 %v524, %v1766
        %v1768 = vpop.f32.mrf.mxu0
        %v1769 = vadd.f32 %v520, %v1768
        %v1770 = vpop.f32.mrf.mxu0
        %v1771 = vadd.f32 %v524, %v1770
        %1772 = vmatprep.mubr.bf16.mxu0 0
        %1773 = vmatmul.mubr.bf16.gmra.mxu0 %v1696
        %v1774 = vpop.f32.mrf.mxu0
        %v1775 = vadd.f32 %v520, %v1774
        %v1776 = vpop.f32.mrf.mxu0
        %v1777 = vadd.f32 %v524, %v1776
        %v1778 = vpop.f32.mrf.mxu0
        %v1779 = vadd.f32 %v520, %v1778
        %v1780 = vpop.f32.mrf.mxu0
        %v1781 = vadd.f32 %v524, %v1780
        %1782 = vmatprep.mubr.bf16.mxu0 0
        %1783 = vmatmul.mubr.bf16.gmra.mxu0 %v1697
        %v1784 = vpop.f32.mrf.mxu0
        %v1785 = vadd.f32 %v520, %v1784
        %v1786 = vpop.f32.mrf.mxu0
        %v1787 = vadd.f32 %v524, %v1786
        %v1788 = vpop.f32.mrf.mxu0
        %v1789 = vadd.f32 %v520, %v1788
        %v1790 = vpop.f32.mrf.mxu0
        %v1791 = vadd.f32 %v524, %v1790
        %1792 = vmatprep.mubr.bf16.mxu0 0
        %1793 = vmatmul.mubr.bf16.gmra.mxu0 %v1698
        %v1794 = vpop.f32.mrf.mxu0
        %v1795 = vadd.f32 %v520, %v1794
        %v1796 = vpop.f32.mrf.mxu0
        %v1797 = vadd.f32 %v524, %v1796
        %v1798 = vpop.f32.mrf.mxu0
        %v1799 = vadd.f32 %v520, %v1798
        %v1800 = vpop.f32.mrf.mxu0
        %v1801 = vadd.f32 %v524, %v1800
        %1802 = vmatprep.mubr.bf16.mxu0 0
        %1803 = vmatmul.mubr.bf16.gmra.mxu0 %v1699
        %v1804 = vpop.f32.mrf.mxu0
        %v1805 = vadd.f32 %v520, %v1804
        %v1806 = vpop.f32.mrf.mxu0
        %v1807 = vadd.f32 %v524, %v1806
        %v1808 = vpop.f32.mrf.mxu0
        %v1809 = vadd.f32 %v520, %v1808
        %v1810 = vpop.f32.mrf.mxu0
        %v1811 = vadd.f32 %v524, %v1810
        %1812 = vdwg.mxu0
        %v1813 = vxor.u32 %v1735, 2147483648
        %v1814 = vxor.u32 %v1737, 2147483648
        %v1815 = vxor.u32 %v1739, 2147483648
        %v1816 = vxor.u32 %v1741, 2147483648
        %v1817 = vxor.u32 %v1745, 2147483648
        %v1818 = vxor.u32 %v1747, 2147483648
        %v1819 = vxor.u32 %v1749, 2147483648
        %v1820 = vxor.u32 %v1751, 2147483648
        %v1821 = vxor.u32 %v1755, 2147483648
        %v1822 = vxor.u32 %v1757, 2147483648
        %v1823 = vxor.u32 %v1759, 2147483648
        %v1824 = vxor.u32 %v1761, 2147483648
        %v1825 = vxor.u32 %v1765, 2147483648
        %v1826 = vxor.u32 %v1767, 2147483648
        %v1827 = vxor.u32 %v1769, 2147483648
        %v1828 = vxor.u32 %v1771, 2147483648
        %v1829 = vxor.u32 %v1775, 2147483648
        %v1830 = vxor.u32 %v1777, 2147483648
        %v1831 = vxor.u32 %v1779, 2147483648
        %v1832 = vxor.u32 %v1781, 2147483648
        %v1833 = vxor.u32 %v1785, 2147483648
        %v1834 = vxor.u32 %v1787, 2147483648
        %v1835 = vxor.u32 %v1789, 2147483648
        %v1836 = vxor.u32 %v1791, 2147483648
        %v1837 = vxor.u32 %v1795, 2147483648
        %v1838 = vxor.u32 %v1797, 2147483648
        %v1839 = vxor.u32 %v1799, 2147483648
        %v1840 = vxor.u32 %v1801, 2147483648
        %v1841 = vxor.u32 %v1805, 2147483648
        %v1842 = vxor.u32 %v1807, 2147483648
        %v1843 = vxor.u32 %v1809, 2147483648
        %v1844 = vxor.u32 %v1811, 2147483648
        %v1845 = vmul.f32 %v1813, 1.442695
        %v1846 = vpow.pop %v1845
        %v1847 = vmul.f32 %v1814, 1.442695
        %v1848 = vpow.pop %v1847
        %v1849 = vmul.f32 %v1815, 1.442695
        %v1850 = vpow.pop %v1849
        %v1851 = vmul.f32 %v1816, 1.442695
        %v1852 = vpow.pop %v1851
        %v1853 = vmul.f32 %v1817, 1.442695
        %v1854 = vpow.pop %v1853
        %v1855 = vmul.f32 %v1818, 1.442695
        %v1856 = vpow.pop %v1855
        %v1857 = vmul.f32 %v1819, 1.442695
        %v1858 = vpow.pop %v1857
        %v1859 = vmul.f32 %v1820, 1.442695
        %v1860 = vpow.pop %v1859
        %v1861 = vmul.f32 %v1821, 1.442695
        %v1862 = vpow.pop %v1861
        %v1863 = vmul.f32 %v1822, 1.442695
        %v1864 = vpow.pop %v1863
        %v1865 = vmul.f32 %v1823, 1.442695
        %v1866 = vpow.pop %v1865
        %v1867 = vmul.f32 %v1824, 1.442695
        %v1868 = vpow.pop %v1867
        %v1869 = vmul.f32 %v1825, 1.442695
        %v1870 = vpow.pop %v1869
        %v1871 = vmul.f32 %v1826, 1.442695
        %v1872 = vpow.pop %v1871
        %v1873 = vmul.f32 %v1827, 1.442695
        %v1874 = vpow.pop %v1873
        %v1875 = vmul.f32 %v1828, 1.442695
        %v1876 = vpow.pop %v1875
        %v1877 = vmul.f32 %v1829, 1.442695
        %v1878 = vpow.pop %v1877
        %v1879 = vmul.f32 %v1830, 1.442695
        %v1880 = vpow.pop %v1879
        %v1881 = vmul.f32 %v1831, 1.442695
        %v1882 = vpow.pop %v1881
        %v1883 = vmul.f32 %v1832, 1.442695
        %v1884 = vpow.pop %v1883
        %v1885 = vmul.f32 %v1833, 1.442695
        %v1886 = vpow.pop %v1885
        %v1887 = vmul.f32 %v1834, 1.442695
        %v1888 = vpow.pop %v1887
        %v1889 = vmul.f32 %v1835, 1.442695
        %v1890 = vpow.pop %v1889
        %v1891 = vmul.f32 %v1836, 1.442695
        %v1892 = vpow.pop %v1891
        %v1893 = vmul.f32 %v1837, 1.442695
        %v1894 = vpow.pop %v1893
        %v1895 = vmul.f32 %v1838, 1.442695
        %v1896 = vpow.pop %v1895
        %v1897 = vmul.f32 %v1839, 1.442695
        %v1898 = vpow.pop %v1897
        %v1899 = vmul.f32 %v1840, 1.442695
        %v1900 = vpow.pop %v1899
        %v1901 = vmul.f32 %v1841, 1.442695
        %v1902 = vpow.pop %v1901
        %v1903 = vmul.f32 %v1842, 1.442695
        %v1904 = vpow.pop %v1903
        %v1905 = vmul.f32 %v1843, 1.442695
        %v1906 = vpow.pop %v1905
        %v1907 = vmul.f32 %v1844, 1.442695
        %v1908 = vpow.pop %v1907
        %v1909 = vadd.f32 %v1846, 1.0
        %v1910 = vadd.f32 %v1848, 1.0
        %v1911 = vadd.f32 %v1850, 1.0
        %v1912 = vadd.f32 %v1852, 1.0
        %v1913 = vadd.f32 %v1854, 1.0
        %v1914 = vadd.f32 %v1856, 1.0
        %v1915 = vadd.f32 %v1858, 1.0
        %v1916 = vadd.f32 %v1860, 1.0
        %v1917 = vadd.f32 %v1862, 1.0
        %v1918 = vadd.f32 %v1864, 1.0
        %v1919 = vadd.f32 %v1866, 1.0
        %v1920 = vadd.f32 %v1868, 1.0
        %v1921 = vadd.f32 %v1870, 1.0
        %v1922 = vadd.f32 %v1872, 1.0
        %v1923 = vadd.f32 %v1874, 1.0
        %v1924 = vadd.f32 %v1876, 1.0
        %v1925 = vadd.f32 %v1878, 1.0
        %v1926 = vadd.f32 %v1880, 1.0
        %v1927 = vadd.f32 %v1882, 1.0
        %v1928 = vadd.f32 %v1884, 1.0
        %v1929 = vadd.f32 %v1886, 1.0
        %v1930 = vadd.f32 %v1888, 1.0
        %v1931 = vadd.f32 %v1890, 1.0
        %v1932 = vadd.f32 %v1892, 1.0
        %v1933 = vadd.f32 %v1894, 1.0
        %v1934 = vadd.f32 %v1896, 1.0
        %v1935 = vadd.f32 %v1898, 1.0
        %v1936 = vadd.f32 %v1900, 1.0
        %v1937 = vadd.f32 %v1902, 1.0
        %v1938 = vadd.f32 %v1904, 1.0
        %v1939 = vadd.f32 %v1906, 1.0
        %v1940 = vadd.f32 %v1908, 1.0
        %v1941 = vrcp.pop %v1909
        %v1942 = vmul.f32 1.0, %v1941
        %v1943 = vrcp.pop %v1910
        %v1944 = vmul.f32 1.0, %v1943
        %v1945 = vrcp.pop %v1911
        %v1946 = vmul.f32 1.0, %v1945
        %v1947 = vrcp.pop %v1912
        %v1948 = vmul.f32 1.0, %v1947
        %v1949 = vrcp.pop %v1913
        %v1950 = vmul.f32 1.0, %v1949
        %v1951 = vrcp.pop %v1914
        %v1952 = vmul.f32 1.0, %v1951
        %v1953 = vrcp.pop %v1915
        %v1954 = vmul.f32 1.0, %v1953
        %v1955 = vrcp.pop %v1916
        %v1956 = vmul.f32 1.0, %v1955
        %v1957 = vrcp.pop %v1917
        %v1958 = vmul.f32 1.0, %v1957
        %v1959 = vrcp.pop %v1918
        %v1960 = vmul.f32 1.0, %v1959
        %v1961 = vrcp.pop %v1919
        %v1962 = vmul.f32 1.0, %v1961
        %v1963 = vrcp.pop %v1920
        %v1964 = vmul.f32 1.0, %v1963
        %v1965 = vrcp.pop %v1921
        %v1966 = vmul.f32 1.0, %v1965
        %v1967 = vrcp.pop %v1922
        %v1968 = vmul.f32 1.0, %v1967
        %v1969 = vrcp.pop %v1923
        %v1970 = vmul.f32 1.0, %v1969
        %v1971 = vrcp.pop %v1924
        %v1972 = vmul.f32 1.0, %v1971
        %v1973 = vrcp.pop %v1925
        %v1974 = vmul.f32 1.0, %v1973
        %v1975 = vrcp.pop %v1926
        %v1976 = vmul.f32 1.0, %v1975
        %v1977 = vrcp.pop %v1927
        %v1978 = vmul.f32 1.0, %v1977
        %v1979 = vrcp.pop %v1928
        %v1980 = vmul.f32 1.0, %v1979
        %v1981 = vrcp.pop %v1929
        %v1982 = vmul.f32 1.0, %v1981
        %v1983 = vrcp.pop %v1930
        %v1984 = vmul.f32 1.0, %v1983
        %v1985 = vrcp.pop %v1931
        %v1986 = vmul.f32 1.0, %v1985
        %v1987 = vrcp.pop %v1932
        %v1988 = vmul.f32 1.0, %v1987
        %v1989 = vrcp.pop %v1933
        %v1990 = vmul.f32 1.0, %v1989
        %v1991 = vrcp.pop %v1934
        %v1992 = vmul.f32 1.0, %v1991
        %v1993 = vrcp.pop %v1935
        %v1994 = vmul.f32 1.0, %v1993
        %v1995 = vrcp.pop %v1936
        %v1996 = vmul.f32 1.0, %v1995
        %v1997 = vrcp.pop %v1937
        %v1998 = vmul.f32 1.0, %v1997
        %v1999 = vrcp.pop %v1938
        %v2000 = vmul.f32 1.0, %v1999
        %v2001 = vrcp.pop %v1939
        %v2002 = vmul.f32 1.0, %v2001
        %v2003 = vrcp.pop %v1940
        %v2004 = vmul.f32 1.0, %v2003
        %vm2005 = vcmp.gt.f32.partialorder %v1942, %v1660
        %vm2006 = vcmp.gt.f32.partialorder %v1944, %v1661
        %vm2007 = vcmp.gt.f32.partialorder %v1946, %v1662
        %vm2008 = vcmp.gt.f32.partialorder %v1948, %v1663
        %vm2009 = vcmp.gt.f32.partialorder %v1950, %v1664
        %vm2010 = vcmp.gt.f32.partialorder %v1952, %v1665
        %vm2011 = vcmp.gt.f32.partialorder %v1954, %v1666
        %vm2012 = vcmp.gt.f32.partialorder %v1956, %v1667
        %vm2013 = vcmp.gt.f32.partialorder %v1958, %v1668
        %vm2014 = vcmp.gt.f32.partialorder %v1960, %v1669
        %vm2015 = vcmp.gt.f32.partialorder %v1962, %v1670
        %vm2016 = vcmp.gt.f32.partialorder %v1964, %v1671
        %vm2017 = vcmp.gt.f32.partialorder %v1966, %v1672
        %vm2018 = vcmp.gt.f32.partialorder %v1968, %v1673
        %vm2019 = vcmp.gt.f32.partialorder %v1970, %v1674
        %vm2020 = vcmp.gt.f32.partialorder %v1972, %v1675
        %vm2021 = vcmp.gt.f32.partialorder %v1974, %v1676
        %vm2022 = vcmp.gt.f32.partialorder %v1976, %v1677
        %vm2023 = vcmp.gt.f32.partialorder %v1978, %v1678
        %vm2024 = vcmp.gt.f32.partialorder %v1980, %v1679
        %vm2025 = vcmp.gt.f32.partialorder %v1982, %v1680
        %vm2026 = vcmp.gt.f32.partialorder %v1984, %v1681
        %vm2027 = vcmp.gt.f32.partialorder %v1986, %v1682
        %vm2028 = vcmp.gt.f32.partialorder %v1988, %v1683
        %vm2029 = vcmp.gt.f32.partialorder %v1990, %v1684
        %vm2030 = vcmp.gt.f32.partialorder %v1992, %v1685
        %vm2031 = vcmp.gt.f32.partialorder %v1994, %v1686
        %vm2032 = vcmp.gt.f32.partialorder %v1996, %v1687
        %vm2033 = vcmp.gt.f32.partialorder %v1998, %v1688
        %vm2034 = vcmp.gt.f32.partialorder %v2000, %v1689
        %vm2035 = vcmp.gt.f32.partialorder %v2002, %v1690
        %vm2036 = vcmp.gt.f32.partialorder %v2004, %v1691
        %v2037 = vsel %vm2005, 1.0, 0.0
        %v2038 = vsel %vm2006, 1.0, 0.0
        %v2039 = vsel %vm2007, 1.0, 0.0
        %v2040 = vsel %vm2008, 1.0, 0.0
        %v2041 = vsel %vm2009, 1.0, 0.0
        %v2042 = vsel %vm2010, 1.0, 0.0
        %v2043 = vsel %vm2011, 1.0, 0.0
        %v2044 = vsel %vm2012, 1.0, 0.0
        %v2045 = vsel %vm2013, 1.0, 0.0
        %v2046 = vsel %vm2014, 1.0, 0.0
        %v2047 = vsel %vm2015, 1.0, 0.0
        %v2048 = vsel %vm2016, 1.0, 0.0
        %v2049 = vsel %vm2017, 1.0, 0.0
        %v2050 = vsel %vm2018, 1.0, 0.0
        %v2051 = vsel %vm2019, 1.0, 0.0
        %v2052 = vsel %vm2020, 1.0, 0.0
        %v2053 = vsel %vm2021, 1.0, 0.0
        %v2054 = vsel %vm2022, 1.0, 0.0
        %v2055 = vsel %vm2023, 1.0, 0.0
        %v2056 = vsel %vm2024, 1.0, 0.0
        %v2057 = vsel %vm2025, 1.0, 0.0
        %v2058 = vsel %vm2026, 1.0, 0.0
        %v2059 = vsel %vm2027, 1.0, 0.0
        %v2060 = vsel %vm2028, 1.0, 0.0
        %v2061 = vsel %vm2029, 1.0, 0.0
        %v2062 = vsel %vm2030, 1.0, 0.0
        %v2063 = vsel %vm2031, 1.0, 0.0
        %v2064 = vsel %vm2032, 1.0, 0.0
        %v2065 = vsel %vm2033, 1.0, 0.0
        %v2066 = vsel %vm2034, 1.0, 0.0
        %v2067 = vsel %vm2035, 1.0, 0.0
        %v2068 = vsel %vm2036, 1.0, 0.0
        %s2069 = scalar_lea.vmem %s405, 256 [#allocation8]
        %v2070 = vld [vmem:[%s2069] sm:$0xff]
        %v2071 = vld [vmem:[%s2069 + $0x8] sm:$0xff]
        %v2072 = vld [vmem:[%s2069 + $0x10] sm:$0xff]
        %v2073 = vld [vmem:[%s2069 + $0x18] sm:$0xff]
        %v2074 = vld [vmem:[%s2069 + $0x20] sm:$0xff]
        %v2075 = vld [vmem:[%s2069 + $0x28] sm:$0xff]
        %v2076 = vld [vmem:[%s2069 + $0x30] sm:$0xff]
        %v2077 = vld [vmem:[%s2069 + $0x38] sm:$0xff]
        %v2078 = vld [vmem:[%s2069 + $0x40] sm:$0xff]
        %v2079 = vld [vmem:[%s2069 + $0x48] sm:$0xff]
        %v2080 = vld [vmem:[%s2069 + $0x50] sm:$0xff]
        %v2081 = vld [vmem:[%s2069 + $0x58] sm:$0xff]
        %v2082 = vld [vmem:[%s2069 + $0x60] sm:$0xff]
        %v2083 = vld [vmem:[%s2069 + $0x68] sm:$0xff]
        %v2084 = vld [vmem:[%s2069 + $0x70] sm:$0xff]
        %v2085 = vld [vmem:[%s2069 + $0x78] sm:$0xff]
        %v2086 = vpack.c.bf16 %v2039, %v2037
        %v2087 = vpack.c.bf16 %v2040, %v2038
        %v2088 = vpack.c.bf16 %v2043, %v2041
        %v2089 = vpack.c.bf16 %v2044, %v2042
        %v2090 = vpack.c.bf16 %v2047, %v2045
        %v2091 = vpack.c.bf16 %v2048, %v2046
        %v2092 = vpack.c.bf16 %v2051, %v2049
        %v2093 = vpack.c.bf16 %v2052, %v2050
        %v2094 = vpack.c.bf16 %v2055, %v2053
        %v2095 = vpack.c.bf16 %v2056, %v2054
        %v2096 = vpack.c.bf16 %v2059, %v2057
        %v2097 = vpack.c.bf16 %v2060, %v2058
        %v2098 = vpack.c.bf16 %v2063, %v2061
        %v2099 = vpack.c.bf16 %v2064, %v2062
        %v2100 = vpack.c.bf16 %v2067, %v2065
        %v2101 = vpack.c.bf16 %v2068, %v2066
        %2102 = vmatprep.subr.bf16.mxu0 0
        %2103 = vmatpush1.bf16.msra.mxu0 %v662
        %2104 = vmatprep.subr.bf16.mxu0 0
        %2105 = vmatpush1.bf16.msra.mxu0 %v661
        %2106 = vmatprep.subr.bf16.mxu0 0
        %2107 = vmatpush1.bf16.msra.mxu0 %v660
        %2108 = vmatprep.subr.bf16.mxu0 0
        %2109 = vmatpush1.bf16.msra.mxu0 %v659
        %2110 = vmatprep.subr.bf16.mxu0 0
        %2111 = vmatpush1.bf16.msra.mxu0 %v658
        %2112 = vmatprep.subr.bf16.mxu0 0
        %2113 = vmatpush1.bf16.msra.mxu0 %v657
        %2114 = vmatprep.subr.bf16.mxu0 0
        %2115 = vmatpush1.bf16.msra.mxu0 %v656
        %2116 = vmatprep.subr.bf16.mxu0 0
        %2117 = vmatpush1.bf16.msra.mxu0 %v655
        %2118 = vmatprep.subr.bf16.mxu0 0
        %2119 = vmatpush2.bf16.msra.mxu0 %v670
        %2120 = vmatprep.subr.bf16.mxu0 0
        %2121 = vmatpush2.bf16.msra.mxu0 %v669
        %2122 = vmatprep.subr.bf16.mxu0 0
        %2123 = vmatpush2.bf16.msra.mxu0 %v668
        %2124 = vmatprep.subr.bf16.mxu0 0
        %2125 = vmatpush2.bf16.msra.mxu0 %v667
        %2126 = vmatprep.subr.bf16.mxu0 0
        %2127 = vmatpush2.bf16.msra.mxu0 %v666
        %2128 = vmatprep.subr.bf16.mxu0 0
        %2129 = vmatpush2.bf16.msra.mxu0 %v665
        %2130 = vmatprep.subr.bf16.mxu0 0
        %2131 = vmatpush2.bf16.msra.mxu0 %v664
        %2132 = vmatprep.subr.bf16.mxu0 0
        %2133 = vmatpush2.bf16.msra.mxu0 %v663
        %2134 = vmatprep.mubr.bf16.mxu0 %v2087
        %2135 = vmatmul.mubr.bf16.gmra.mxu0 %v2086
        %v2136 = vpop.f32.mrf.mxu0
        %v2137 = vadd.f32 %v513, %v2136
        %v2138 = vpop.f32.mrf.mxu0
        %v2139 = vpop.f32.mrf.mxu0
        %v2140 = vadd.f32 %v513, %v2139
        %v2141 = vpop.f32.mrf.mxu0
        %2142 = vmatprep.mubr.bf16.mxu0 %v2089
        %2143 = vmatmul.mubr.bf16.gmra.mxu0 %v2088
        %v2144 = vpop.f32.mrf.mxu0
        %v2145 = vadd.f32 %v513, %v2144
        %v2146 = vpop.f32.mrf.mxu0
        %v2147 = vpop.f32.mrf.mxu0
        %v2148 = vadd.f32 %v513, %v2147
        %v2149 = vpop.f32.mrf.mxu0
        %2150 = vmatprep.mubr.bf16.mxu0 %v2091
        %2151 = vmatmul.mubr.bf16.gmra.mxu0 %v2090
        %v2152 = vpop.f32.mrf.mxu0
        %v2153 = vadd.f32 %v513, %v2152
        %v2154 = vpop.f32.mrf.mxu0
        %v2155 = vpop.f32.mrf.mxu0
        %v2156 = vadd.f32 %v513, %v2155
        %v2157 = vpop.f32.mrf.mxu0
        %2158 = vmatprep.mubr.bf16.mxu0 %v2093
        %2159 = vmatmul.mubr.bf16.gmra.mxu0 %v2092
        %v2160 = vpop.f32.mrf.mxu0
        %v2161 = vadd.f32 %v513, %v2160
        %v2162 = vpop.f32.mrf.mxu0
        %v2163 = vpop.f32.mrf.mxu0
        %v2164 = vadd.f32 %v513, %v2163
        %v2165 = vpop.f32.mrf.mxu0
        %2166 = vmatprep.mubr.bf16.mxu0 %v2095
        %2167 = vmatmul.mubr.bf16.gmra.mxu0 %v2094
        %v2168 = vpop.f32.mrf.mxu0
        %v2169 = vadd.f32 %v513, %v2168
        %v2170 = vpop.f32.mrf.mxu0
        %v2171 = vpop.f32.mrf.mxu0
        %v2172 = vadd.f32 %v513, %v2171
        %v2173 = vpop.f32.mrf.mxu0
        %2174 = vmatprep.mubr.bf16.mxu0 %v2097
        %2175 = vmatmul.mubr.bf16.gmra.mxu0 %v2096
        %v2176 = vpop.f32.mrf.mxu0
        %v2177 = vadd.f32 %v513, %v2176
        %v2178 = vpop.f32.mrf.mxu0
        %v2179 = vpop.f32.mrf.mxu0
        %v2180 = vadd.f32 %v513, %v2179
        %v2181 = vpop.f32.mrf.mxu0
        %2182 = vmatprep.mubr.bf16.mxu0 %v2099
        %2183 = vmatmul.mubr.bf16.gmra.mxu0 %v2098
        %v2184 = vpop.f32.mrf.mxu0
        %v2185 = vadd.f32 %v513, %v2184
        %v2186 = vpop.f32.mrf.mxu0
        %v2187 = vpop.f32.mrf.mxu0
        %v2188 = vadd.f32 %v513, %v2187
        %v2189 = vpop.f32.mrf.mxu0
        %2190 = vmatprep.mubr.bf16.mxu0 %v2101
        %2191 = vmatmul.mubr.bf16.gmra.mxu0 %v2100
        %v2192 = vpop.f32.mrf.mxu0
        %v2193 = vadd.f32 %v513, %v2192
        %v2194 = vpop.f32.mrf.mxu0
        %v2195 = vpop.f32.mrf.mxu0
        %v2196 = vadd.f32 %v513, %v2195
        %v2197 = vpop.f32.mrf.mxu0
        %2198 = vdwg.mxu0
        %v2199 = vxor.u32 %v2137, 2147483648
        %v2200 = vxor.u32 %v2140, 2147483648
        %v2201 = vxor.u32 %v2145, 2147483648
        %v2202 = vxor.u32 %v2148, 2147483648
        %v2203 = vxor.u32 %v2153, 2147483648
        %v2204 = vxor.u32 %v2156, 2147483648
        %v2205 = vxor.u32 %v2161, 2147483648
        %v2206 = vxor.u32 %v2164, 2147483648
        %v2207 = vxor.u32 %v2169, 2147483648
        %v2208 = vxor.u32 %v2172, 2147483648
        %v2209 = vxor.u32 %v2177, 2147483648
        %v2210 = vxor.u32 %v2180, 2147483648
        %v2211 = vxor.u32 %v2185, 2147483648
        %v2212 = vxor.u32 %v2188, 2147483648
        %v2213 = vxor.u32 %v2193, 2147483648
        %v2214 = vxor.u32 %v2196, 2147483648
        %v2215 = vmul.f32 %v2199, 1.442695
        %v2216 = vpow.pop %v2215
        %v2217 = vmul.f32 %v2200, 1.442695
        %v2218 = vpow.pop %v2217
        %v2219 = vmul.f32 %v2201, 1.442695
        %v2220 = vpow.pop %v2219
        %v2221 = vmul.f32 %v2202, 1.442695
        %v2222 = vpow.pop %v2221
        %v2223 = vmul.f32 %v2203, 1.442695
        %v2224 = vpow.pop %v2223
        %v2225 = vmul.f32 %v2204, 1.442695
        %v2226 = vpow.pop %v2225
        %v2227 = vmul.f32 %v2205, 1.442695
        %v2228 = vpow.pop %v2227
        %v2229 = vmul.f32 %v2206, 1.442695
        %v2230 = vpow.pop %v2229
        %v2231 = vmul.f32 %v2207, 1.442695
        %v2232 = vpow.pop %v2231
        %v2233 = vmul.f32 %v2208, 1.442695
        %v2234 = vpow.pop %v2233
        %v2235 = vmul.f32 %v2209, 1.442695
        %v2236 = vpow.pop %v2235
        %v2237 = vmul.f32 %v2210, 1.442695
        %v2238 = vpow.pop %v2237
        %v2239 = vmul.f32 %v2211, 1.442695
        %v2240 = vpow.pop %v2239
        %v2241 = vmul.f32 %v2212, 1.442695
        %v2242 = vpow.pop %v2241
        %v2243 = vmul.f32 %v2213, 1.442695
        %v2244 = vpow.pop %v2243
        %v2245 = vmul.f32 %v2214, 1.442695
        %v2246 = vpow.pop %v2245
        %v2247 = vadd.f32 %v2216, 1.0
        %v2248 = vadd.f32 %v2218, 1.0
        %v2249 = vadd.f32 %v2220, 1.0
        %v2250 = vadd.f32 %v2222, 1.0
        %v2251 = vadd.f32 %v2224, 1.0
        %v2252 = vadd.f32 %v2226, 1.0
        %v2253 = vadd.f32 %v2228, 1.0
        %v2254 = vadd.f32 %v2230, 1.0
        %v2255 = vadd.f32 %v2232, 1.0
        %v2256 = vadd.f32 %v2234, 1.0
        %v2257 = vadd.f32 %v2236, 1.0
        %v2258 = vadd.f32 %v2238, 1.0
        %v2259 = vadd.f32 %v2240, 1.0
        %v2260 = vadd.f32 %v2242, 1.0
        %v2261 = vadd.f32 %v2244, 1.0
        %v2262 = vadd.f32 %v2246, 1.0
        %v2263 = vrcp.pop %v2247
        %v2264 = vmul.f32 1.0, %v2263
        %v2265 = vrcp.pop %v2248
        %v2266 = vmul.f32 1.0, %v2265
        %v2267 = vrcp.pop %v2249
        %v2268 = vmul.f32 1.0, %v2267
        %v2269 = vrcp.pop %v2250
        %v2270 = vmul.f32 1.0, %v2269
        %v2271 = vrcp.pop %v2251
        %v2272 = vmul.f32 1.0, %v2271
        %v2273 = vrcp.pop %v2252
        %v2274 = vmul.f32 1.0, %v2273
        %v2275 = vrcp.pop %v2253
        %v2276 = vmul.f32 1.0, %v2275
        %v2277 = vrcp.pop %v2254
        %v2278 = vmul.f32 1.0, %v2277
        %v2279 = vrcp.pop %v2255
        %v2280 = vmul.f32 1.0, %v2279
        %v2281 = vrcp.pop %v2256
        %v2282 = vmul.f32 1.0, %v2281
        %v2283 = vrcp.pop %v2257
        %v2284 = vmul.f32 1.0, %v2283
        %v2285 = vrcp.pop %v2258
        %v2286 = vmul.f32 1.0, %v2285
        %v2287 = vrcp.pop %v2259
        %v2288 = vmul.f32 1.0, %v2287
        %v2289 = vrcp.pop %v2260
        %v2290 = vmul.f32 1.0, %v2289
        %v2291 = vrcp.pop %v2261
        %v2292 = vmul.f32 1.0, %v2291
        %v2293 = vrcp.pop %v2262
        %v2294 = vmul.f32 1.0, %v2293
        %vm2295 = vcmp.gt.f32.partialorder %v2264, %v2070
        %vm2296 = vcmp.gt.f32.partialorder %v2266, %v2071
        %vm2297 = vcmp.gt.f32.partialorder %v2268, %v2072
        %vm2298 = vcmp.gt.f32.partialorder %v2270, %v2073
        %vm2299 = vcmp.gt.f32.partialorder %v2272, %v2074
        %vm2300 = vcmp.gt.f32.partialorder %v2274, %v2075
        %vm2301 = vcmp.gt.f32.partialorder %v2276, %v2076
        %vm2302 = vcmp.gt.f32.partialorder %v2278, %v2077
        %vm2303 = vcmp.gt.f32.partialorder %v2280, %v2078
        %vm2304 = vcmp.gt.f32.partialorder %v2282, %v2079
        %vm2305 = vcmp.gt.f32.partialorder %v2284, %v2080
        %vm2306 = vcmp.gt.f32.partialorder %v2286, %v2081
        %vm2307 = vcmp.gt.f32.partialorder %v2288, %v2082
        %vm2308 = vcmp.gt.f32.partialorder %v2290, %v2083
        %vm2309 = vcmp.gt.f32.partialorder %v2292, %v2084
        %vm2310 = vcmp.gt.f32.partialorder %v2294, %v2085
        %v2311 = vsel %vm2295, 1.0, 0.0
        %v2312 = vsel %vm2296, 1.0, 0.0
        %v2313 = vsel %vm2297, 1.0, 0.0
        %v2314 = vsel %vm2298, 1.0, 0.0
        %v2315 = vsel %vm2299, 1.0, 0.0
        %v2316 = vsel %vm2300, 1.0, 0.0
        %v2317 = vsel %vm2301, 1.0, 0.0
        %v2318 = vsel %vm2302, 1.0, 0.0
        %v2319 = vsel %vm2303, 1.0, 0.0
        %v2320 = vsel %vm2304, 1.0, 0.0
        %v2321 = vsel %vm2305, 1.0, 0.0
        %v2322 = vsel %vm2306, 1.0, 0.0
        %v2323 = vsel %vm2307, 1.0, 0.0
        %v2324 = vsel %vm2308, 1.0, 0.0
        %v2325 = vsel %vm2309, 1.0, 0.0
        %v2326 = vsel %vm2310, 1.0, 0.0
        %s2327 = scalar_lea.vmem %s414, 512 [#allocation10]
        %v2328 = vld [vmem:[%s2327] sm:$0xff]
        %v2329 = vld [vmem:[%s2327 + $0x8] sm:$0xff]
        %v2330 = vld [vmem:[%s2327 + $0x10] sm:$0xff]
        %v2331 = vld [vmem:[%s2327 + $0x18] sm:$0xff]
        %v2332 = vld [vmem:[%s2327 + $0x20] sm:$0xff]
        %v2333 = vld [vmem:[%s2327 + $0x28] sm:$0xff]
        %v2334 = vld [vmem:[%s2327 + $0x30] sm:$0xff]
        %v2335 = vld [vmem:[%s2327 + $0x38] sm:$0xff]
        %v2336 = vld [vmem:[%s2327 + $0x40] sm:$0xff]
        %v2337 = vld [vmem:[%s2327 + $0x48] sm:$0xff]
        %v2338 = vld [vmem:[%s2327 + $0x50] sm:$0xff]
        %v2339 = vld [vmem:[%s2327 + $0x58] sm:$0xff]
        %v2340 = vld [vmem:[%s2327 + $0x60] sm:$0xff]
        %v2341 = vld [vmem:[%s2327 + $0x68] sm:$0xff]
        %v2342 = vld [vmem:[%s2327 + $0x70] sm:$0xff]
        %v2343 = vld [vmem:[%s2327 + $0x78] sm:$0xff]
        %v2344 = vld [vmem:[%s2327 + $0x80] sm:$0xff]
        %v2345 = vld [vmem:[%s2327 + $0x88] sm:$0xff]
        %v2346 = vld [vmem:[%s2327 + $0x90] sm:$0xff]
        %v2347 = vld [vmem:[%s2327 + $0x98] sm:$0xff]
        %v2348 = vld [vmem:[%s2327 + $0xa0] sm:$0xff]
        %v2349 = vld [vmem:[%s2327 + $0xa8] sm:$0xff]
        %v2350 = vld [vmem:[%s2327 + $0xb0] sm:$0xff]
        %v2351 = vld [vmem:[%s2327 + $0xb8] sm:$0xff]
        %v2352 = vld [vmem:[%s2327 + $0xc0] sm:$0xff]
        %v2353 = vld [vmem:[%s2327 + $0xc8] sm:$0xff]
        %v2354 = vld [vmem:[%s2327 + $0xd0] sm:$0xff]
        %v2355 = vld [vmem:[%s2327 + $0xd8] sm:$0xff]
        %v2356 = vld [vmem:[%s2327 + $0xe0] sm:$0xff]
        %v2357 = vld [vmem:[%s2327 + $0xe8] sm:$0xff]
        %v2358 = vld [vmem:[%s2327 + $0xf0] sm:$0xff]
        %v2359 = vld [vmem:[%s2327 + $0xf8] sm:$0xff]
        %v2360 = vpack.c.bf16 %v2312, %v2311
        %v2361 = vpack.c.bf16 %v2314, %v2313
        %v2362 = vpack.c.bf16 %v2316, %v2315
        %v2363 = vpack.c.bf16 %v2318, %v2317
        %v2364 = vpack.c.bf16 %v2320, %v2319
        %v2365 = vpack.c.bf16 %v2322, %v2321
        %v2366 = vpack.c.bf16 %v2324, %v2323
        %v2367 = vpack.c.bf16 %v2326, %v2325
        %2368 = vmatprep.subr.bf16.mxu0 %v1015
        %2369 = vmatpush1.bf16.msra.mxu0 %v1014
        %2370 = vmatprep.subr.bf16.mxu0 %v1013
        %2371 = vmatpush1.bf16.msra.mxu0 %v1012
        %2372 = vmatprep.subr.bf16.mxu0 %v1011
        %2373 = vmatpush1.bf16.msra.mxu0 %v1010
        %2374 = vmatprep.subr.bf16.mxu0 %v1009
        %2375 = vmatpush1.bf16.msra.mxu0 %v1008
        %2376 = vmatprep.subr.bf16.mxu0 %v1007
        %2377 = vmatpush1.bf16.msra.mxu0 %v1006
        %2378 = vmatprep.subr.bf16.mxu0 %v1005
        %2379 = vmatpush1.bf16.msra.mxu0 %v1004
        %2380 = vmatprep.subr.bf16.mxu0 %v1003
        %2381 = vmatpush1.bf16.msra.mxu0 %v1002
        %2382 = vmatprep.subr.bf16.mxu0 %v1001
        %2383 = vmatpush1.bf16.msra.mxu0 %v1000
        %2384 = vmatprep.subr.bf16.mxu0 0
        %2385 = vmatpush2.bf16.msra.mxu0 0
        %2386 = vmatprep.subr.bf16.mxu0 0
        %2387 = vmatpush2.bf16.msra.mxu0 0
        %2388 = vmatprep.subr.bf16.mxu0 0
        %2389 = vmatpush2.bf16.msra.mxu0 0
        %2390 = vmatprep.subr.bf16.mxu0 0
        %2391 = vmatpush2.bf16.msra.mxu0 0
        %2392 = vmatprep.subr.bf16.mxu0 0
        %2393 = vmatpush2.bf16.msra.mxu0 0
        %2394 = vmatprep.subr.bf16.mxu0 0
        %2395 = vmatpush2.bf16.msra.mxu0 0
        %2396 = vmatprep.subr.bf16.mxu0 0
        %2397 = vmatpush2.bf16.msra.mxu0 0
        %2398 = vmatprep.subr.bf16.mxu0 0
        %2399 = vmatpush2.bf16.msra.mxu0 0
        %2400 = vmatprep.mubr.bf16.mxu0 0
        %2401 = vmatmul.mubr.bf16.gmra.mxu0 %v2360
        %v2402 = vpop.f32.mrf.mxu0
        %v2403 = vadd.f32 %v520, %v2402
        %v2404 = vpop.f32.mrf.mxu0
        %v2405 = vadd.f32 %v524, %v2404
        %v2406 = vpop.f32.mrf.mxu0
        %v2407 = vadd.f32 %v520, %v2406
        %v2408 = vpop.f32.mrf.mxu0
        %v2409 = vadd.f32 %v524, %v2408
        %2410 = vmatprep.mubr.bf16.mxu0 0
        %2411 = vmatmul.mubr.bf16.gmra.mxu0 %v2361
        %v2412 = vpop.f32.mrf.mxu0
        %v2413 = vadd.f32 %v520, %v2412
        %v2414 = vpop.f32.mrf.mxu0
        %v2415 = vadd.f32 %v524, %v2414
        %v2416 = vpop.f32.mrf.mxu0
        %v2417 = vadd.f32 %v520, %v2416
        %v2418 = vpop.f32.mrf.mxu0
        %v2419 = vadd.f32 %v524, %v2418
        %2420 = vmatprep.mubr.bf16.mxu0 0
        %2421 = vmatmul.mubr.bf16.gmra.mxu0 %v2362
        %v2422 = vpop.f32.mrf.mxu0
        %v2423 = vadd.f32 %v520, %v2422
        %v2424 = vpop.f32.mrf.mxu0
        %v2425 = vadd.f32 %v524, %v2424
        %v2426 = vpop.f32.mrf.mxu0
        %v2427 = vadd.f32 %v520, %v2426
        %v2428 = vpop.f32.mrf.mxu0
        %v2429 = vadd.f32 %v524, %v2428
        %2430 = vmatprep.mubr.bf16.mxu0 0
        %2431 = vmatmul.mubr.bf16.gmra.mxu0 %v2363
        %v2432 = vpop.f32.mrf.mxu0
        %v2433 = vadd.f32 %v520, %v2432
        %v2434 = vpop.f32.mrf.mxu0
        %v2435 = vadd.f32 %v524, %v2434
        %v2436 = vpop.f32.mrf.mxu0
        %v2437 = vadd.f32 %v520, %v2436
        %v2438 = vpop.f32.mrf.mxu0
        %v2439 = vadd.f32 %v524, %v2438
        %2440 = vmatprep.mubr.bf16.mxu0 0
        %2441 = vmatmul.mubr.bf16.gmra.mxu0 %v2364
        %v2442 = vpop.f32.mrf.mxu0
        %v2443 = vadd.f32 %v520, %v2442
        %v2444 = vpop.f32.mrf.mxu0
        %v2445 = vadd.f32 %v524, %v2444
        %v2446 = vpop.f32.mrf.mxu0
        %v2447 = vadd.f32 %v520, %v2446
        %v2448 = vpop.f32.mrf.mxu0
        %v2449 = vadd.f32 %v524, %v2448
        %2450 = vmatprep.mubr.bf16.mxu0 0
        %2451 = vmatmul.mubr.bf16.gmra.mxu0 %v2365
        %v2452 = vpop.f32.mrf.mxu0
        %v2453 = vadd.f32 %v520, %v2452
        %v2454 = vpop.f32.mrf.mxu0
        %v2455 = vadd.f32 %v524, %v2454
        %v2456 = vpop.f32.mrf.mxu0
        %v2457 = vadd.f32 %v520, %v2456
        %v2458 = vpop.f32.mrf.mxu0
        %v2459 = vadd.f32 %v524, %v2458
        %2460 = vmatprep.mubr.bf16.mxu0 0
        %2461 = vmatmul.mubr.bf16.gmra.mxu0 %v2366
        %v2462 = vpop.f32.mrf.mxu0
        %v2463 = vadd.f32 %v520, %v2462
        %v2464 = vpop.f32.mrf.mxu0
        %v2465 = vadd.f32 %v524, %v2464
        %v2466 = vpop.f32.mrf.mxu0
        %v2467 = vadd.f32 %v520, %v2466
        %v2468 = vpop.f32.mrf.mxu0
        %v2469 = vadd.f32 %v524, %v2468
        %2470 = vmatprep.mubr.bf16.mxu0 0
        %2471 = vmatmul.mubr.bf16.gmra.mxu0 %v2367
        %v2472 = vpop.f32.mrf.mxu0
        %v2473 = vadd.f32 %v520, %v2472
        %v2474 = vpop.f32.mrf.mxu0
        %v2475 = vadd.f32 %v524, %v2474
        %v2476 = vpop.f32.mrf.mxu0
        %v2477 = vadd.f32 %v520, %v2476
        %v2478 = vpop.f32.mrf.mxu0
        %v2479 = vadd.f32 %v524, %v2478
        %2480 = vdwg.mxu0
        %v2481 = vxor.u32 %v2403, 2147483648
        %v2482 = vxor.u32 %v2405, 2147483648
        %v2483 = vxor.u32 %v2407, 2147483648
        %v2484 = vxor.u32 %v2409, 2147483648
        %v2485 = vxor.u32 %v2413, 2147483648
        %v2486 = vxor.u32 %v2415, 2147483648
        %v2487 = vxor.u32 %v2417, 2147483648
        %v2488 = vxor.u32 %v2419, 2147483648
        %v2489 = vxor.u32 %v2423, 2147483648
        %v2490 = vxor.u32 %v2425, 2147483648
        %v2491 = vxor.u32 %v2427, 2147483648
        %v2492 = vxor.u32 %v2429, 2147483648
        %v2493 = vxor.u32 %v2433, 2147483648
        %v2494 = vxor.u32 %v2435, 2147483648
        %v2495 = vxor.u32 %v2437, 2147483648
        %v2496 = vxor.u32 %v2439, 2147483648
        %v2497 = vxor.u32 %v2443, 2147483648
        %v2498 = vxor.u32 %v2445, 2147483648
        %v2499 = vxor.u32 %v2447, 2147483648
        %v2500 = vxor.u32 %v2449, 2147483648
        %v2501 = vxor.u32 %v2453, 2147483648
        %v2502 = vxor.u32 %v2455, 2147483648
        %v2503 = vxor.u32 %v2457, 2147483648
        %v2504 = vxor.u32 %v2459, 2147483648
        %v2505 = vxor.u32 %v2463, 2147483648
        %v2506 = vxor.u32 %v2465, 2147483648
        %v2507 = vxor.u32 %v2467, 2147483648
        %v2508 = vxor.u32 %v2469, 2147483648
        %v2509 = vxor.u32 %v2473, 2147483648
        %v2510 = vxor.u32 %v2475, 2147483648
        %v2511 = vxor.u32 %v2477, 2147483648
        %v2512 = vxor.u32 %v2479, 2147483648
        %v2513 = vmul.f32 %v2481, 1.442695
        %v2514 = vpow.pop %v2513
        %v2515 = vmul.f32 %v2482, 1.442695
        %v2516 = vpow.pop %v2515
        %v2517 = vmul.f32 %v2483, 1.442695
        %v2518 = vpow.pop %v2517
        %v2519 = vmul.f32 %v2484, 1.442695
        %v2520 = vpow.pop %v2519
        %v2521 = vmul.f32 %v2485, 1.442695
        %v2522 = vpow.pop %v2521
        %v2523 = vmul.f32 %v2486, 1.442695
        %v2524 = vpow.pop %v2523
        %v2525 = vmul.f32 %v2487, 1.442695
        %v2526 = vpow.pop %v2525
        %v2527 = vmul.f32 %v2488, 1.442695
        %v2528 = vpow.pop %v2527
        %v2529 = vmul.f32 %v2489, 1.442695
        %v2530 = vpow.pop %v2529
        %v2531 = vmul.f32 %v2490, 1.442695
        %v2532 = vpow.pop %v2531
        %v2533 = vmul.f32 %v2491, 1.442695
        %v2534 = vpow.pop %v2533
        %v2535 = vmul.f32 %v2492, 1.442695
        %v2536 = vpow.pop %v2535
        %v2537 = vmul.f32 %v2493, 1.442695
        %v2538 = vpow.pop %v2537
        %v2539 = vmul.f32 %v2494, 1.442695
        %v2540 = vpow.pop %v2539
        %v2541 = vmul.f32 %v2495, 1.442695
        %v2542 = vpow.pop %v2541
        %v2543 = vmul.f32 %v2496, 1.442695
        %v2544 = vpow.pop %v2543
        %v2545 = vmul.f32 %v2497, 1.442695
        %v2546 = vpow.pop %v2545
        %v2547 = vmul.f32 %v2498, 1.442695
        %v2548 = vpow.pop %v2547
        %v2549 = vmul.f32 %v2499, 1.442695
        %v2550 = vpow.pop %v2549
        %v2551 = vmul.f32 %v2500, 1.442695
        %v2552 = vpow.pop %v2551
        %v2553 = vmul.f32 %v2501, 1.442695
        %v2554 = vpow.pop %v2553
        %v2555 = vmul.f32 %v2502, 1.442695
        %v2556 = vpow.pop %v2555
        %v2557 = vmul.f32 %v2503, 1.442695
        %v2558 = vpow.pop %v2557
        %v2559 = vmul.f32 %v2504, 1.442695
        %v2560 = vpow.pop %v2559
        %v2561 = vmul.f32 %v2505, 1.442695
        %v2562 = vpow.pop %v2561
        %v2563 = vmul.f32 %v2506, 1.442695
        %v2564 = vpow.pop %v2563
        %v2565 = vmul.f32 %v2507, 1.442695
        %v2566 = vpow.pop %v2565
        %v2567 = vmul.f32 %v2508, 1.442695
        %v2568 = vpow.pop %v2567
        %v2569 = vmul.f32 %v2509, 1.442695
        %v2570 = vpow.pop %v2569
        %v2571 = vmul.f32 %v2510, 1.442695
        %v2572 = vpow.pop %v2571
        %v2573 = vmul.f32 %v2511, 1.442695
        %v2574 = vpow.pop %v2573
        %v2575 = vmul.f32 %v2512, 1.442695
        %v2576 = vpow.pop %v2575
        %v2577 = vadd.f32 %v2514, 1.0
        %v2578 = vadd.f32 %v2516, 1.0
        %v2579 = vadd.f32 %v2518, 1.0
        %v2580 = vadd.f32 %v2520, 1.0
        %v2581 = vadd.f32 %v2522, 1.0
        %v2582 = vadd.f32 %v2524, 1.0
        %v2583 = vadd.f32 %v2526, 1.0
        %v2584 = vadd.f32 %v2528, 1.0
        %v2585 = vadd.f32 %v2530, 1.0
        %v2586 = vadd.f32 %v2532, 1.0
        %v2587 = vadd.f32 %v2534, 1.0
        %v2588 = vadd.f32 %v2536, 1.0
        %v2589 = vadd.f32 %v2538, 1.0
        %v2590 = vadd.f32 %v2540, 1.0
        %v2591 = vadd.f32 %v2542, 1.0
        %v2592 = vadd.f32 %v2544, 1.0
        %v2593 = vadd.f32 %v2546, 1.0
        %v2594 = vadd.f32 %v2548, 1.0
        %v2595 = vadd.f32 %v2550, 1.0
        %v2596 = vadd.f32 %v2552, 1.0
        %v2597 = vadd.f32 %v2554, 1.0
        %v2598 = vadd.f32 %v2556, 1.0
        %v2599 = vadd.f32 %v2558, 1.0
        %v2600 = vadd.f32 %v2560, 1.0
        %v2601 = vadd.f32 %v2562, 1.0
        %v2602 = vadd.f32 %v2564, 1.0
        %v2603 = vadd.f32 %v2566, 1.0
        %v2604 = vadd.f32 %v2568, 1.0
        %v2605 = vadd.f32 %v2570, 1.0
        %v2606 = vadd.f32 %v2572, 1.0
        %v2607 = vadd.f32 %v2574, 1.0
        %v2608 = vadd.f32 %v2576, 1.0
        %v2609 = vrcp.pop %v2577
        %v2610 = vmul.f32 1.0, %v2609
        %v2611 = vrcp.pop %v2578
        %v2612 = vmul.f32 1.0, %v2611
        %v2613 = vrcp.pop %v2579
        %v2614 = vmul.f32 1.0, %v2613
        %v2615 = vrcp.pop %v2580
        %v2616 = vmul.f32 1.0, %v2615
        %v2617 = vrcp.pop %v2581
        %v2618 = vmul.f32 1.0, %v2617
        %v2619 = vrcp.pop %v2582
        %v2620 = vmul.f32 1.0, %v2619
        %v2621 = vrcp.pop %v2583
        %v2622 = vmul.f32 1.0, %v2621
        %v2623 = vrcp.pop %v2584
        %v2624 = vmul.f32 1.0, %v2623
        %v2625 = vrcp.pop %v2585
        %v2626 = vmul.f32 1.0, %v2625
        %v2627 = vrcp.pop %v2586
        %v2628 = vmul.f32 1.0, %v2627
        %v2629 = vrcp.pop %v2587
        %v2630 = vmul.f32 1.0, %v2629
        %v2631 = vrcp.pop %v2588
        %v2632 = vmul.f32 1.0, %v2631
        %v2633 = vrcp.pop %v2589
        %v2634 = vmul.f32 1.0, %v2633
        %v2635 = vrcp.pop %v2590
        %v2636 = vmul.f32 1.0, %v2635
        %v2637 = vrcp.pop %v2591
        %v2638 = vmul.f32 1.0, %v2637
        %v2639 = vrcp.pop %v2592
        %v2640 = vmul.f32 1.0, %v2639
        %v2641 = vrcp.pop %v2593
        %v2642 = vmul.f32 1.0, %v2641
        %v2643 = vrcp.pop %v2594
        %v2644 = vmul.f32 1.0, %v2643
        %v2645 = vrcp.pop %v2595
        %v2646 = vmul.f32 1.0, %v2645
        %v2647 = vrcp.pop %v2596
        %v2648 = vmul.f32 1.0, %v2647
        %v2649 = vrcp.pop %v2597
        %v2650 = vmul.f32 1.0, %v2649
        %v2651 = vrcp.pop %v2598
        %v2652 = vmul.f32 1.0, %v2651
        %v2653 = vrcp.pop %v2599
        %v2654 = vmul.f32 1.0, %v2653
        %v2655 = vrcp.pop %v2600
        %v2656 = vmul.f32 1.0, %v2655
        %v2657 = vrcp.pop %v2601
        %v2658 = vmul.f32 1.0, %v2657
        %v2659 = vrcp.pop %v2602
        %v2660 = vmul.f32 1.0, %v2659
        %v2661 = vrcp.pop %v2603
        %v2662 = vmul.f32 1.0, %v2661
        %v2663 = vrcp.pop %v2604
        %v2664 = vmul.f32 1.0, %v2663
        %v2665 = vrcp.pop %v2605
        %v2666 = vmul.f32 1.0, %v2665
        %v2667 = vrcp.pop %v2606
        %v2668 = vmul.f32 1.0, %v2667
        %v2669 = vrcp.pop %v2607
        %v2670 = vmul.f32 1.0, %v2669
        %v2671 = vrcp.pop %v2608
        %v2672 = vmul.f32 1.0, %v2671
        %vm2673 = vcmp.gt.f32.partialorder %v2610, %v2328
        %vm2674 = vcmp.gt.f32.partialorder %v2612, %v2329
        %vm2675 = vcmp.gt.f32.partialorder %v2614, %v2330
        %vm2676 = vcmp.gt.f32.partialorder %v2616, %v2331
        %vm2677 = vcmp.gt.f32.partialorder %v2618, %v2332
        %vm2678 = vcmp.gt.f32.partialorder %v2620, %v2333
        %vm2679 = vcmp.gt.f32.partialorder %v2622, %v2334
        %vm2680 = vcmp.gt.f32.partialorder %v2624, %v2335
        %vm2681 = vcmp.gt.f32.partialorder %v2626, %v2336
        %vm2682 = vcmp.gt.f32.partialorder %v2628, %v2337
        %vm2683 = vcmp.gt.f32.partialorder %v2630, %v2338
        %vm2684 = vcmp.gt.f32.partialorder %v2632, %v2339
        %vm2685 = vcmp.gt.f32.partialorder %v2634, %v2340
        %vm2686 = vcmp.gt.f32.partialorder %v2636, %v2341
        %vm2687 = vcmp.gt.f32.partialorder %v2638, %v2342
        %vm2688 = vcmp.gt.f32.partialorder %v2640, %v2343
        %vm2689 = vcmp.gt.f32.partialorder %v2642, %v2344
        %vm2690 = vcmp.gt.f32.partialorder %v2644, %v2345
        %vm2691 = vcmp.gt.f32.partialorder %v2646, %v2346
        %vm2692 = vcmp.gt.f32.partialorder %v2648, %v2347
        %vm2693 = vcmp.gt.f32.partialorder %v2650, %v2348
        %vm2694 = vcmp.gt.f32.partialorder %v2652, %v2349
        %vm2695 = vcmp.gt.f32.partialorder %v2654, %v2350
        %vm2696 = vcmp.gt.f32.partialorder %v2656, %v2351
        %vm2697 = vcmp.gt.f32.partialorder %v2658, %v2352
        %vm2698 = vcmp.gt.f32.partialorder %v2660, %v2353
        %vm2699 = vcmp.gt.f32.partialorder %v2662, %v2354
        %vm2700 = vcmp.gt.f32.partialorder %v2664, %v2355
        %vm2701 = vcmp.gt.f32.partialorder %v2666, %v2356
        %vm2702 = vcmp.gt.f32.partialorder %v2668, %v2357
        %vm2703 = vcmp.gt.f32.partialorder %v2670, %v2358
        %vm2704 = vcmp.gt.f32.partialorder %v2672, %v2359
        %v2705 = vsel %vm2673, 1.0, 0.0
        %v2706 = vsel %vm2674, 1.0, 0.0
        %v2707 = vsel %vm2675, 1.0, 0.0
        %v2708 = vsel %vm2676, 1.0, 0.0
        %v2709 = vsel %vm2677, 1.0, 0.0
        %v2710 = vsel %vm2678, 1.0, 0.0
        %v2711 = vsel %vm2679, 1.0, 0.0
        %v2712 = vsel %vm2680, 1.0, 0.0
        %v2713 = vsel %vm2681, 1.0, 0.0
        %v2714 = vsel %vm2682, 1.0, 0.0
        %v2715 = vsel %vm2683, 1.0, 0.0
        %v2716 = vsel %vm2684, 1.0, 0.0
        %v2717 = vsel %vm2685, 1.0, 0.0
        %v2718 = vsel %vm2686, 1.0, 0.0
        %v2719 = vsel %vm2687, 1.0, 0.0
        %v2720 = vsel %vm2688, 1.0, 0.0
        %v2721 = vsel %vm2689, 1.0, 0.0
        %v2722 = vsel %vm2690, 1.0, 0.0
        %v2723 = vsel %vm2691, 1.0, 0.0
        %v2724 = vsel %vm2692, 1.0, 0.0
        %v2725 = vsel %vm2693, 1.0, 0.0
        %v2726 = vsel %vm2694, 1.0, 0.0
        %v2727 = vsel %vm2695, 1.0, 0.0
        %v2728 = vsel %vm2696, 1.0, 0.0
        %v2729 = vsel %vm2697, 1.0, 0.0
        %v2730 = vsel %vm2698, 1.0, 0.0
        %v2731 = vsel %vm2699, 1.0, 0.0
        %v2732 = vsel %vm2700, 1.0, 0.0
        %v2733 = vsel %vm2701, 1.0, 0.0
        %v2734 = vsel %vm2702, 1.0, 0.0
        %v2735 = vsel %vm2703, 1.0, 0.0
        %v2736 = vsel %vm2704, 1.0, 0.0
        %2737 = vst [vmem:[%s454] sm:$0xff] %v2705
        %2738 = vst [vmem:[%s454 + $0x8] sm:$0xff] %v2706
        %2739 = vst [vmem:[%s454 + $0x10] sm:$0xff] %v2707
        %2740 = vst [vmem:[%s454 + $0x18] sm:$0xff] %v2708
        %2741 = vst [vmem:[%s454 + $0x20] sm:$0xff] %v2709
        %2742 = vst [vmem:[%s454 + $0x28] sm:$0xff] %v2710
        %2743 = vst [vmem:[%s454 + $0x30] sm:$0xff] %v2711
        %2744 = vst [vmem:[%s454 + $0x38] sm:$0xff] %v2712
        %2745 = vst [vmem:[%s454 + $0x40] sm:$0xff] %v2713
        %2746 = vst [vmem:[%s454 + $0x48] sm:$0xff] %v2714
        %2747 = vst [vmem:[%s454 + $0x50] sm:$0xff] %v2715
        %2748 = vst [vmem:[%s454 + $0x58] sm:$0xff] %v2716
        %2749 = vst [vmem:[%s454 + $0x60] sm:$0xff] %v2717
        %2750 = vst [vmem:[%s454 + $0x68] sm:$0xff] %v2718
        %2751 = vst [vmem:[%s454 + $0x70] sm:$0xff] %v2719
        %2752 = vst [vmem:[%s454 + $0x78] sm:$0xff] %v2720
        %2753 = vst [vmem:[%s454 + $0x80] sm:$0xff] %v2721
        %2754 = vst [vmem:[%s454 + $0x88] sm:$0xff] %v2722
        %2755 = vst [vmem:[%s454 + $0x90] sm:$0xff] %v2723
        %2756 = vst [vmem:[%s454 + $0x98] sm:$0xff] %v2724
        %2757 = vst [vmem:[%s454 + $0xa0] sm:$0xff] %v2725
        %2758 = vst [vmem:[%s454 + $0xa8] sm:$0xff] %v2726
        %2759 = vst [vmem:[%s454 + $0xb0] sm:$0xff] %v2727
        %2760 = vst [vmem:[%s454 + $0xb8] sm:$0xff] %v2728
        %2761 = vst [vmem:[%s454 + $0xc0] sm:$0xff] %v2729
        %2762 = vst [vmem:[%s454 + $0xc8] sm:$0xff] %v2730
        %2763 = vst [vmem:[%s454 + $0xd0] sm:$0xff] %v2731
        %2764 = vst [vmem:[%s454 + $0xd8] sm:$0xff] %v2732
        %2765 = vst [vmem:[%s454 + $0xe0] sm:$0xff] %v2733
        %2766 = vst [vmem:[%s454 + $0xe8] sm:$0xff] %v2734
        %2767 = vst [vmem:[%s454 + $0xf0] sm:$0xff] %v2735
        %2768 = vst [vmem:[%s454 + $0xf8] sm:$0xff] %v2736
        %s2769 = sand.u32 %s198, 1
        %s2770 = scalar_lea.sflag [#allocation4], %s2769
        %s2771 = sand.u32 %s198, 1
        %s2772 = smul.addr %s2771, 256
        %s2773 = scalar_lea.vmem [#allocation11], %s2772
        // Predicated region
        $region69: #{tpu_custom_call.1} parent=47 // pred_check
          %p2774 = pneg %p208
        $region70: #{tpu_custom_call.1} parent=47 // pred_check_branch
          %2776 = sbr.rel (%p2774) target = $region72
        $region71: #{tpu_custom_call.1} parent=47 // pred_region
          %s2777 = smul.u32 16, %s28
          %s2779 = ssub.s32 4096, 4096
          %2780 = vsyncadd %s2770, %s2779
          %s2781 = smul.addr %s2777, 2
          %s2782 = smul.addr %s2781, 128
          %s2783 = scalar_lea.hbm %s7, %s2782
          %s2784 = sshll.u32 %s2773, 4
          %s2785 = int_to_ptr.vmem [resolvable:$true] %s2784
          %2790 = dma.vmem_to_hbm [thread:$0]  %s2785, 4096, %s2783, %s2770, 256, 256, 16
        $region72: #{tpu_custom_call.1} parent=47 // pred_fallthru
          _
      $region48: #{tpu_custom_call.1} parent=5 // pred_fallthru
        _
      %p2791 = scmp.le.s32.totalorder 2, %s23
      // Predicated region
      $region73: #{tpu_custom_call.1} parent=5 // pred_check
        %p2792 = pneg %p2791
      $region74: #{tpu_custom_call.1} parent=5 // pred_check_branch
        %2794 = sbr.rel (%p2792) target = $region76
      $region75: #{tpu_custom_call.1} parent=5 // pred_region
        %s2795 = ssub.s32 %s23, 2
        // Predicated region
        $region77: #{tpu_custom_call.1} parent=75 // pred_check
          %p2796 = pneg %p214
        $region78: #{tpu_custom_call.1} parent=75 // pred_check_branch
          %2798 = sbr.rel (%p2796) target = $region80
        $region79: #{tpu_custom_call.1} parent=75 // pred_region
          %s2799 = sand.u32 %s199, 1
          %s2800 = scalar_lea.sflag [#allocation4], %s2799
          %s2801 = sand.u32 %s199, 1
          %s2802 = smul.addr %s2801, 256
          %s2803 = scalar_lea.vmem [#allocation11], %s2802
          %2804 = dma.done %s2800, 4096
        $region80: #{tpu_custom_call.1} parent=75 // pred_fallthru
          _
      $region76: #{tpu_custom_call.1} parent=5 // pred_fallthru
        _
    $region6: #{tpu_custom_call.1} parent=1 // loop_footer
      %s27 = sadd.s32 1, %s23
    $region7: #{tpu_custom_call.1} parent=1 // loop_footer_branch
      %22 = sbr.rel target = $region3
    $region8: #{tpu_custom_call.1} parent=1 // loop_exit
      _
    %2805 = vsyncpa [#allocation3], 1
    %s2806 = scalar_lea.sflag [#allocation3], 1
    %2807 = vsyncpa %s2806, 1
    %2808 = vsyncpa [#allocation6], 1
    %2809 = vsyncpa [#allocation9], 1
    %s2810 = scalar_lea.sflag [#allocation9], 1
    %2811 = vsyncpa %s2810, 1
    %2812 = vsyncpa [#allocation4], 1
    %s2813 = scalar_lea.sflag [#allocation4], 1
    %2814 = vsyncpa %s2813, 1

</llo_original>
